<compile_context>
chip_gen: v5e
topology: v5e:2x2
jax: 0.10.0
libtpu: 0.0.40
codegen_flags: <defaults>
</compile_context>

<pallas_src>
import jax
import jax.numpy as jnp
from jax.experimental import pallas as pl
from jax.experimental.pallas import tpu as pltpu


# ---------------- fused Pallas kernel ----------------

def _hetero_classifier_kernel(a_uu_ref, a_uv_ref, a_vu_ref, x_u_ref, x_v_ref,
                              w1_ref, w2_ref, b_ref, wc_ref, bc_ref,
                              logits_ref, hg1_ref):
    """Whole HeteroClassifier forward for TB graphs of the batch (grid=(B//TB,)).

    a_*_ref : (TB, n, n)   RAW 0/1 per-relation adjacency (dst rows, src cols), bf16
              uu: u<-u, uv: v<-u, vu: u<-v   (normalization is fused below)
    x_*_ref : (TB, n, Fin) node features per ntype, bf16
    w1_ref  : (3, Fin, D)  layer-1 weights, relation order [uu, vu, uv], bf16
    w2_ref  : (3, D, D)    layer-2 weights, same order, bf16
    b_ref   : (3, D)  f32  pre-summed biases: [b1_u, b1_v, b2_total]  (aggregate='sum')
    wc_ref  : (D, C), bc_ref: (1, C)  classifier, f32
    logits_ref: (1, TB, C), hg1_ref: (1, TB, D)
    """
    f32, bf16 = jnp.float32, jnp.bfloat16
    tb, n, fin = x_u_ref.shape
    d = w1_ref.shape[-1]

    # ---- fused DGL GraphConv norm='both': A_hat = D_in^{-1/2} A D_out^{-1/2}, degrees clamped >= 1 ----
    def norm_adj(a_ref):
        a = a_ref[...].astype(f32)                                    # raw 0/1 adjacency (exact in bf16)
        d_in = jnp.maximum(jnp.sum(a, axis=2, keepdims=True), 1.0)    # dst in-degree  (TB, n, 1)
        d_out = jnp.maximum(jnp.sum(a, axis=1, keepdims=True), 1.0)   # src out-degree (TB, 1, n)
        return a * jax.lax.rsqrt(d_in) * jax.lax.rsqrt(d_out)         # f32 (TB, n, n)

    a_uu = norm_adj(a_uu_ref)
    a_uv = norm_adj(a_uv_ref)
    a_vu = norm_adj(a_vu_ref)

    # ---- layer 1: X@W as ONE MXU pass over all TB graphs per relation, then batched A_hat @ (XW) ----
    x_u = x_u_ref[...].reshape(tb * n, fin)       # (TB*n, Fin) bf16
    x_v = x_v_ref[...].reshape(tb * n, fin)

    def xw(x_flat, w):                            # (TB*n, Fin)@(Fin, D) -> (TB, n, D) bf16
        y = jnp.dot(x_flat, w, preferred_element_type=f32)
        return y.reshape(tb, n, d).astype(bf16)

    def spmm(a, h):                               # batched A_hat @ H, bf16 operands, f32 accum
        return jnp.einsum('bij,bjf->bif', a.astype(bf16), h,
                          preferred_element_type=f32)

    b1_u = b_ref[0:1, :]                          # (1, D) = b1_uu + b1_vu
    b1_v = b_ref[1:2, :]                          #        = b1_uv
    b2 = b_ref[2:3, :]                            #        = b2_uu + b2_vu + b2_uv

    h1_u = jnp.maximum(spmm(a_uu, xw(x_u, w1_ref[0]))
                       + spmm(a_vu, xw(x_v, w1_ref[1])) + b1_u, 0.0)   # (TB, n, D) f32, fused ReLU
    h1_v = jnp.maximum(spmm(a_uv, xw(x_u, w1_ref[2])) + b1_v, 0.0)

    # ---- layer 2 collapsed into the mean_nodes readout ----
    # mean over dst nodes of (A_hat @ H1 @ W2) == (dstmean(A_hat) @ H1) @ W2
    # TODO(synk): for variable-size / padded graphs, mean_nodes needs a node mask + true counts.
    m_uu = jnp.mean(a_uu, axis=1, keepdims=True)   # (TB, 1, n)
    m_vu = jnp.mean(a_vu, axis=1, keepdims=True)
    m_uv = jnp.mean(a_uv, axis=1, keepdims=True)

    def pooled(m, h1):                             # (TB, 1, n) x (TB, n, D) -> (TB, D) bf16
        s = jnp.einsum('bij,bjf->bif', m.astype(bf16), h1.astype(bf16),
                       preferred_element_type=f32)
        return s.reshape(tb, d).astype(bf16)

    hg = (jnp.dot(pooled(m_uu, h1_u), w2_ref[0], preferred_element_type=f32)
          + jnp.dot(pooled(m_vu, h1_v), w2_ref[1], preferred_element_type=f32)
          + jnp.dot(pooled(m_uv, h1_u), w2_ref[2], preferred_element_type=f32)
          + b2)                                    # (TB, D) f32

    # ---- readout epilogue: relu, L1 normalize, sigmoid branch, classify ----
    hg = jnp.maximum(hg, 0.0)                                        # F.relu
    l1 = jnp.sum(jnp.abs(hg), axis=1, keepdims=True)                 # F.normalize(p=1, dim=1)
    hg = hg * pl.reciprocal(jnp.maximum(l1, 1e-12), approx=True)
    hg1_ref[0] = jax.nn.sigmoid(hg)                                  # self.sig(hg)
    # TODO(synk): F.dropout(p=0.2) is stochastic; applied as identity (eval semantics).
    logits_ref[0] = jnp.dot(hg, wc_ref[...], preferred_element_type=f32) + bc_ref[...]


# ---------------- wrapper ----------------

def hetero_classifier_forward(a_uu, a_uv, a_vu, x_u, x_v,
                              w1_stack, w2_stack, b_stack, wc, bc, *, tb=None):
    """a_*: (B, n, n) RAW 0/1 adjacency; x_*: (B, n, Fin); w1_stack: (3, Fin, D) [uu, vu, uv];
    w2_stack: (3, D, D); b_stack: (3, D) [b1_u, b1_v, b2_total]; wc: (D, C); bc: (1, C)
    ->  (logits (B, C), hg1 (B, D))."""
    B, n, _ = a_uu.shape
    fin = x_u.shape[-1]
    d = w1_stack.shape[-1]
    c = wc.shape[-1]

    if tb is None:
        tb = max(1, min(B, 128 // n))      # target ~128 rows for the layer-1 X@W MXU pass
    while tb > 1 and B // tb < 2:          # keep >= 2 grid steps so both v7x TensorCores get work
        tb //= 2
    assert B % tb == 0, "pad the batch to a multiple of tb"   # TODO(synk): handle ragged batch sizes
    g = B // tb

    bf16 = jnp.bfloat16
    cast = lambda t: t.astype(bf16)        # halve HBM bytes of the streamed A/X and the W stacks

    logits3, hg13 = pl.pallas_call(
        _hetero_classifier_kernel,
        out_shape=(jax.ShapeDtypeStruct((g, tb, c), jnp.float32),
                   jax.ShapeDtypeStruct((g, tb, d), jnp.float32)),
        grid_spec=pltpu.PrefetchScalarGridSpec(
            num_scalar_prefetch=0,
            grid=(g,),                                           # TB graphs per grid step
            in_specs=[
                pl.BlockSpec((tb, n, n), lambda b: (b, 0, 0)),     # raw A_uu
                pl.BlockSpec((tb, n, n), lambda b: (b, 0, 0)),     # raw A_uv
                pl.BlockSpec((tb, n, n), lambda b: (b, 0, 0)),     # raw A_vu
                pl.BlockSpec((tb, n, fin), lambda b: (b, 0, 0)),   # x_u
                pl.BlockSpec((tb, n, fin), lambda b: (b, 0, 0)),   # x_v
                pl.BlockSpec((3, fin, d), lambda b: (0, 0, 0)),    # W1 stack (constant block -> VMEM-resident)
                pl.BlockSpec((3, d, d), lambda b: (0, 0, 0)),      # W2 stack
                pl.BlockSpec((3, d), lambda b: (0, 0)),            # summed biases
                pl.BlockSpec((d, c), lambda b: (0, 0)),            # Wc
                pl.BlockSpec((1, c), lambda b: (0, 0)),            # bc
            ],
            out_specs=[
                pl.BlockSpec((1, tb, c), lambda b: (b, 0, 0)),     # logits
                pl.BlockSpec((1, tb, d), lambda b: (b, 0, 0)),     # hg1
            ],
        ),
        compiler_params=pltpu.CompilerParams(
            dimension_semantics=("parallel",),          # graphs independent -> shard across TCs
            vmem_limit_bytes=32 * 1024 * 1024,          # explicit scoped-VMEM budget (v7x headroom)
        ),
    )(cast(a_uu), cast(a_uv), cast(a_vu), cast(x_u), cast(x_v),
      cast(w1_stack), cast(w2_stack), b_stack, wc, bc)
    return logits3.reshape(B, c), hg13.reshape(B, d)


if __name__ == "__main__":
    # Small synthetic heterograph: 2 node types ('u','v'), 3 relations
    # ('u','uu','u'), ('u','uv','v'), ('v','vu','u'); B graphs of n nodes per type.
    B, n = 8, 8
    in_dim = 32
    hidden_dim = 32          # classify = nn.Linear(in_dim, C) is applied to hidden_dim
    n_classes = 4            # features, so the original module requires in_dim == hidden_dim

    key = jax.random.PRNGKey(0)
    keys = jax.random.split(key, 24)

    # node features g.ndata['feat'], kept per-graph: (B, n, F)
    x_u = jax.random.normal(keys[0], (B, n, in_dim), jnp.float32)
    x_v = jax.random.normal(keys[1], (B, n, in_dim), jnp.float32)

    # raw per-graph relation adjacencies (0/1); GraphConv normalization is fused into the kernel
    def rand_adj(k):
        return jax.random.bernoulli(k, 0.4, (B, n, n)).astype(jnp.float32)

    A_uu = rand_adj(keys[2])   # u -> u  (dst rows, src cols)
    A_uv = rand_adj(keys[3])   # u -> v
    A_vu = rand_adj(keys[4])   # v -> u

    def wgt(k, shape, scale=0.1):
        return scale * jax.random.normal(k, shape, jnp.float32)

    # RGCN layer-1 params (per relation): GraphConv weight (Fin, Fout) + bias
    W1_uu, b1_uu = wgt(keys[5], (in_dim, hidden_dim)), wgt(keys[6], (hidden_dim,))
    W1_uv, b1_uv = wgt(keys[7], (in_dim, hidden_dim)), wgt(keys[8], (hidden_dim,))
    W1_vu, b1_vu = wgt(keys[9], (in_dim, hidden_dim)), wgt(keys[10], (hidden_dim,))
    # RGCN layer-2 params
    W2_uu, b2_uu = wgt(keys[11], (hidden_dim, hidden_dim)), wgt(keys[12], (hidden_dim,))
    W2_uv, b2_uv = wgt(keys[13], (hidden_dim, hidden_dim)), wgt(keys[14], (hidden_dim,))
    W2_vu, b2_vu = wgt(keys[15], (hidden_dim, hidden_dim)), wgt(keys[16], (hidden_dim,))
    # classifier
    Wc = wgt(keys[17], (hidden_dim, n_classes))
    bc = wgt(keys[18], (n_classes,))

    # pack weights: relation order [uu (dst u), vu (dst u), uv (dst v)]
    W1_stack = jnp.stack([W1_uu, W1_vu, W1_uv])
    W2_stack = jnp.stack([W2_uu, W2_vu, W2_uv])
    # biases pre-summed per dst ntype (aggregate='sum'); layer-2 biases collapse into the readout
    b_stack = jnp.stack([b1_uu + b1_vu,            # layer 1, dst u
                         b1_uv,                    # layer 1, dst v
                         b2_uu + b2_vu + b2_uv])   # layer 2 total -> readout

    # ---- single fused kernel launch ----
    logits, hg1 = hetero_classifier_forward(
        A_uu, A_uv, A_vu, x_u, x_v, W1_stack, W2_stack, b_stack, Wc, bc[None, :])
    jax.block_until_ready((logits, hg1))

    # ---- pure-JAX reference check ----
    hp = jax.lax.Precision.HIGHEST

    def normalize_adj(a):
        # DGL GraphConv norm='both': D_in^{-1/2} A D_out^{-1/2}, degrees clamped >= 1
        d_in = jnp.clip(jnp.sum(a, axis=2), 1.0, None)
        d_out = jnp.clip(jnp.sum(a, axis=1), 1.0, None)
        return a * (d_in ** -0.5)[:, :, None] * (d_out ** -0.5)[:, None, :]

    Ah_uu, Ah_uv, Ah_vu = normalize_adj(A_uu), normalize_adj(A_uv), normalize_adj(A_vu)

    def ref_gconv(a, x, w, b):
        return jnp.einsum('bij,bjf,fg->big', a, x, w, precision=hp) + b

    r1_u = jax.nn.relu(ref_gconv(Ah_uu, x_u, W1_uu, b1_uu)
                       + ref_gconv(Ah_vu, x_v, W1_vu, b1_vu))
    r1_v = jax.nn.relu(ref_gconv(Ah_uv, x_u, W1_uv, b1_uv))
    r2_u = ref_gconv(Ah_uu, r1_u, W2_uu, b2_uu) + ref_gconv(Ah_vu, r1_v, W2_vu, b2_vu)
    r2_v = ref_gconv(Ah_uv, r1_u, W2_uv, b2_uv)
    hg_r = jax.nn.relu(r2_u.mean(axis=1) + r2_v.mean(axis=1))
    hg_r = hg_r / jnp.maximum(jnp.sum(jnp.abs(hg_r), axis=1, keepdims=True), 1e-12)
    hg1_r = jax.nn.sigmoid(hg_r)
    logits_r = jnp.dot(hg_r, Wc, precision=hp) + bc

    assert logits.shape == (B, n_classes) and hg1.shape == (B, hidden_dim)
    assert bool(jnp.allclose(logits, logits_r, rtol=2e-2, atol=2e-2)), \
        ("logits max err", float(jnp.max(jnp.abs(logits - logits_r))))
    assert bool(jnp.allclose(hg1, hg1_r, rtol=2e-2, atol=2e-2)), \
        ("hg1 max err", float(jnp.max(jnp.abs(hg1 - hg1_r))))
    print("KERNEL_OK")
</pallas_src>

<mosaic_0001>
module attributes {stable_mosaic.version = 11 : i64} {
  func.func @_hetero_classifier_kernel(%arg0: i32, %arg1: memref<4x8x8xbf16, #tpu.memory_space<vmem>>, %arg2: memref<4x8x8xbf16, #tpu.memory_space<vmem>>, %arg3: memref<4x8x8xbf16, #tpu.memory_space<vmem>>, %arg4: memref<4x8x32xbf16, #tpu.memory_space<vmem>>, %arg5: memref<4x8x32xbf16, #tpu.memory_space<vmem>>, %arg6: memref<3x32x32xbf16, #tpu.memory_space<vmem>>, %arg7: memref<3x32x32xbf16, #tpu.memory_space<vmem>>, %arg8: memref<3x32xf32, #tpu.memory_space<vmem>>, %arg9: memref<32x4xf32, #tpu.memory_space<vmem>>, %arg10: memref<1x4xf32, #tpu.memory_space<vmem>>, %arg11: memref<1x4x4xf32, #tpu.memory_space<vmem>>, %arg12: memref<1x4x32xf32, #tpu.memory_space<vmem>>) attributes {dimension_semantics = [#tpu.dimension_semantics<parallel>], iteration_bounds = array<i64: 2>, scalar_prefetch = 0 : i64, scratch_operands = 0 : i64, tpu.core_type = #tpu.core_type<tc>, window_params = [{transform_indices = @transform_0, window_bounds = array<i64: 4, 8, 8>}, {transform_indices = @transform_1, window_bounds = array<i64: 4, 8, 8>}, {transform_indices = @transform_2, window_bounds = array<i64: 4, 8, 8>}, {transform_indices = @transform_3, window_bounds = array<i64: 4, 8, 32>}, {transform_indices = @transform_4, window_bounds = array<i64: 4, 8, 32>}, {pipeline_mode = #tpu.pipeline_mode<synchronous>, transform_indices = @transform_5, window_bounds = array<i64: 3, 32, 32>}, {pipeline_mode = #tpu.pipeline_mode<synchronous>, transform_indices = @transform_6, window_bounds = array<i64: 3, 32, 32>}, {pipeline_mode = #tpu.pipeline_mode<synchronous>, transform_indices = @transform_7, window_bounds = array<i64: 3, 32>}, {pipeline_mode = #tpu.pipeline_mode<synchronous>, transform_indices = @transform_8, window_bounds = array<i64: 32, 4>}, {pipeline_mode = #tpu.pipeline_mode<synchronous>, transform_indices = @transform_9, window_bounds = array<i64: 1, 4>}, {transform_indices = @transform_10, window_bounds = array<i64: 1, 4, 4>}, {transform_indices = @transform_11, window_bounds = array<i64: 1, 4, 32>}]} {
    %c0 = arith.constant 0 : index
    %c0_0 = arith.constant 0 : index
    %c0_1 = arith.constant 0 : index
    %0 = vector.load %arg1[%c0, %c0_0, %c0_1] : memref<4x8x8xbf16, #tpu.memory_space<vmem>>, vector<4x8x8xbf16>
    %1 = arith.extf %0 : vector<4x8x8xbf16> to vector<4x8x8xf32>
    %cst = arith.constant dense<0.000000e+00> : vector<4x8xf32>
    %2 = vector.multi_reduction <add>, %1, %cst [2] : vector<4x8x8xf32> to vector<4x8xf32>
    %3 = vector.shape_cast %2 : vector<4x8xf32> to vector<4x8x1xf32>
    %cst_2 = arith.constant 1.000000e+00 : f32
    %4 = vector.broadcast %cst_2 : f32 to vector<4x8x1xf32>
    %5 = arith.maximumf %3, %4 : vector<4x8x1xf32>
    %cst_3 = arith.constant dense<0.000000e+00> : vector<4x8xf32>
    %6 = vector.multi_reduction <add>, %1, %cst_3 [1] : vector<4x8x8xf32> to vector<4x8xf32>
    %7 = vector.shape_cast %6 : vector<4x8xf32> to vector<4x1x8xf32>
    %cst_4 = arith.constant 1.000000e+00 : f32
    %8 = vector.broadcast %cst_4 : f32 to vector<4x1x8xf32>
    %9 = arith.maximumf %7, %8 : vector<4x1x8xf32>
    %10 = math.rsqrt %5 : vector<4x8x1xf32>
    %11 = vector.broadcast %10 : vector<4x8x1xf32> to vector<4x8x8xf32>
    %12 = arith.mulf %1, %11 : vector<4x8x8xf32>
    %13 = math.rsqrt %9 : vector<4x1x8xf32>
    %14 = vector.broadcast %13 : vector<4x1x8xf32> to vector<4x8x8xf32>
    %15 = arith.mulf %12, %14 : vector<4x8x8xf32>
    %c0_5 = arith.constant 0 : index
    %c0_6 = arith.constant 0 : index
    %c0_7 = arith.constant 0 : index
    %16 = vector.load %arg2[%c0_5, %c0_6, %c0_7] : memref<4x8x8xbf16, #tpu.memory_space<vmem>>, vector<4x8x8xbf16>
    %17 = arith.extf %16 : vector<4x8x8xbf16> to vector<4x8x8xf32>
    %cst_8 = arith.constant dense<0.000000e+00> : vector<4x8xf32>
    %18 = vector.multi_reduction <add>, %17, %cst_8 [2] : vector<4x8x8xf32> to vector<4x8xf32>
    %19 = vector.shape_cast %18 : vector<4x8xf32> to vector<4x8x1xf32>
    %cst_9 = arith.constant 1.000000e+00 : f32
    %20 = vector.broadcast %cst_9 : f32 to vector<4x8x1xf32>
    %21 = arith.maximumf %19, %20 : vector<4x8x1xf32>
    %cst_10 = arith.constant dense<0.000000e+00> : vector<4x8xf32>
    %22 = vector.multi_reduction <add>, %17, %cst_10 [1] : vector<4x8x8xf32> to vector<4x8xf32>
    %23 = vector.shape_cast %22 : vector<4x8xf32> to vector<4x1x8xf32>
    %cst_11 = arith.constant 1.000000e+00 : f32
    %24 = vector.broadcast %cst_11 : f32 to vector<4x1x8xf32>
    %25 = arith.maximumf %23, %24 : vector<4x1x8xf32>
    %26 = math.rsqrt %21 : vector<4x8x1xf32>
    %27 = vector.broadcast %26 : vector<4x8x1xf32> to vector<4x8x8xf32>
    %28 = arith.mulf %17, %27 : vector<4x8x8xf32>
    %29 = math.rsqrt %25 : vector<4x1x8xf32>
    %30 = vector.broadcast %29 : vector<4x1x8xf32> to vector<4x8x8xf32>
    %31 = arith.mulf %28, %30 : vector<4x8x8xf32>
    %c0_12 = arith.constant 0 : index
    %c0_13 = arith.constant 0 : index
    %c0_14 = arith.constant 0 : index
    %32 = vector.load %arg3[%c0_12, %c0_13, %c0_14] : memref<4x8x8xbf16, #tpu.memory_space<vmem>>, vector<4x8x8xbf16>
    %33 = arith.extf %32 : vector<4x8x8xbf16> to vector<4x8x8xf32>
    %cst_15 = arith.constant dense<0.000000e+00> : vector<4x8xf32>
    %34 = vector.multi_reduction <add>, %33, %cst_15 [2] : vector<4x8x8xf32> to vector<4x8xf32>
    %35 = vector.shape_cast %34 : vector<4x8xf32> to vector<4x8x1xf32>
    %cst_16 = arith.constant 1.000000e+00 : f32
    %36 = vector.broadcast %cst_16 : f32 to vector<4x8x1xf32>
    %37 = arith.maximumf %35, %36 : vector<4x8x1xf32>
    %cst_17 = arith.constant dense<0.000000e+00> : vector<4x8xf32>
    %38 = vector.multi_reduction <add>, %33, %cst_17 [1] : vector<4x8x8xf32> to vector<4x8xf32>
    %39 = vector.shape_cast %38 : vector<4x8xf32> to vector<4x1x8xf32>
    %cst_18 = arith.constant 1.000000e+00 : f32
    %40 = vector.broadcast %cst_18 : f32 to vector<4x1x8xf32>
    %41 = arith.maximumf %39, %40 : vector<4x1x8xf32>
    %42 = math.rsqrt %37 : vector<4x8x1xf32>
    %43 = vector.broadcast %42 : vector<4x8x1xf32> to vector<4x8x8xf32>
    %44 = arith.mulf %33, %43 : vector<4x8x8xf32>
    %45 = math.rsqrt %41 : vector<4x1x8xf32>
    %46 = vector.broadcast %45 : vector<4x1x8xf32> to vector<4x8x8xf32>
    %47 = arith.mulf %44, %46 : vector<4x8x8xf32>
    %c0_19 = arith.constant 0 : index
    %c0_20 = arith.constant 0 : index
    %c0_21 = arith.constant 0 : index
    %48 = vector.load %arg4[%c0_19, %c0_20, %c0_21] : memref<4x8x32xbf16, #tpu.memory_space<vmem>>, vector<4x8x32xbf16>
    %49 = vector.shape_cast %48 : vector<4x8x32xbf16> to vector<32x32xbf16>
    %c0_22 = arith.constant 0 : index
    %c0_23 = arith.constant 0 : index
    %c0_24 = arith.constant 0 : index
    %50 = vector.load %arg5[%c0_22, %c0_23, %c0_24] : memref<4x8x32xbf16, #tpu.memory_space<vmem>>, vector<4x8x32xbf16>
    %51 = vector.shape_cast %50 : vector<4x8x32xbf16> to vector<32x32xbf16>
    %c0_25 = arith.constant 0 : index
    %c0_26 = arith.constant 0 : index
    %52 = vector.load %arg8[%c0_25, %c0_26] : memref<3x32xf32, #tpu.memory_space<vmem>>, vector<1x32xf32>
    %c1 = arith.constant 1 : index
    %c0_27 = arith.constant 0 : index
    %53 = vector.load %arg8[%c1, %c0_27] : memref<3x32xf32, #tpu.memory_space<vmem>>, vector<1x32xf32>
    %c2 = arith.constant 2 : index
    %c0_28 = arith.constant 0 : index
    %54 = vector.load %arg8[%c2, %c0_28] : memref<3x32xf32, #tpu.memory_space<vmem>>, vector<1x32xf32>
    %c0_29 = arith.constant 0 : index
    %c0_30 = arith.constant 0 : index
    %c0_31 = arith.constant 0 : index
    %55 = vector.load %arg6[%c0_29, %c0_30, %c0_31] : memref<3x32x32xbf16, #tpu.memory_space<vmem>>, vector<1x32x32xbf16>
    %56 = vector.shape_cast %55 : vector<1x32x32xbf16> to vector<32x32xbf16>
    %cst_32 = arith.constant dense<0.000000e+00> : vector<32x32xf32>
    %57 = tpu.matmul %49, %56, %cst_32 {dimension_numbers = #tpu.dot_dimension_numbers<[1], [0], [0], [1], [0, 0, 1, 1], [], []>} : vector<32x32xbf16>, vector<32x32xbf16>, vector<32x32xf32> -> vector<32x32xf32>
    %58 = vector.shape_cast %57 : vector<32x32xf32> to vector<4x8x32xf32>
    %59 = arith.truncf %58 : vector<4x8x32xf32> to vector<4x8x32xbf16>
    %60 = arith.truncf %15 : vector<4x8x8xf32> to vector<4x8x8xbf16>
    "tpu.trace_start"() <{level = 10 : i32, message = "bij,bjf->bif"}> : () -> ()
    %cst_33 = arith.constant dense<0.000000e+00> : vector<4x8x32xf32>
    %61 = tpu.matmul %60, %59, %cst_33 {dimension_numbers = #tpu.dot_dimension_numbers<[2], [1], [1], [2], [0, 0, 0, 1, 1, 2], [0], [0]>} : vector<4x8x8xbf16>, vector<4x8x32xbf16>, vector<4x8x32xf32> -> vector<4x8x32xf32>
    "tpu.trace_stop"() : () -> ()
    %c1_34 = arith.constant 1 : index
    %c0_35 = arith.constant 0 : index
    %c0_36 = arith.constant 0 : index
    %62 = vector.load %arg6[%c1_34, %c0_35, %c0_36] : memref<3x32x32xbf16, #tpu.memory_space<vmem>>, vector<1x32x32xbf16>
    %63 = vector.shape_cast %62 : vector<1x32x32xbf16> to vector<32x32xbf16>
    %cst_37 = arith.constant dense<0.000000e+00> : vector<32x32xf32>
    %64 = tpu.matmul %51, %63, %cst_37 {dimension_numbers = #tpu.dot_dimension_numbers<[1], [0], [0], [1], [0, 0, 1, 1], [], []>} : vector<32x32xbf16>, vector<32x32xbf16>, vector<32x32xf32> -> vector<32x32xf32>
    %65 = vector.shape_cast %64 : vector<32x32xf32> to vector<4x8x32xf32>
    %66 = arith.truncf %65 : vector<4x8x32xf32> to vector<4x8x32xbf16>
    %67 = arith.truncf %47 : vector<4x8x8xf32> to vector<4x8x8xbf16>
    "tpu.trace_start"() <{level = 10 : i32, message = "bij,bjf->bif"}> : () -> ()
    %cst_38 = arith.constant dense<0.000000e+00> : vector<4x8x32xf32>
    %68 = tpu.matmul %67, %66, %cst_38 {dimension_numbers = #tpu.dot_dimension_numbers<[2], [1], [1], [2], [0, 0, 0, 1, 1, 2], [0], [0]>} : vector<4x8x8xbf16>, vector<4x8x32xbf16>, vector<4x8x32xf32> -> vector<4x8x32xf32>
    "tpu.trace_stop"() : () -> ()
    %69 = arith.addf %61, %68 : vector<4x8x32xf32>
    %70 = vector.shape_cast %52 : vector<1x32xf32> to vector<1x1x32xf32>
    %71 = vector.broadcast %70 : vector<1x1x32xf32> to vector<4x8x32xf32>
    %72 = arith.addf %69, %71 : vector<4x8x32xf32>
    %cst_39 = arith.constant 0.000000e+00 : f32
    %73 = vector.broadcast %cst_39 : f32 to vector<4x8x32xf32>
    %74 = arith.maximumf %72, %73 : vector<4x8x32xf32>
    %c2_40 = arith.constant 2 : index
    %c0_41 = arith.constant 0 : index
    %c0_42 = arith.constant 0 : index
    %75 = vector.load %arg6[%c2_40, %c0_41, %c0_42] : memref<3x32x32xbf16, #tpu.memory_space<vmem>>, vector<1x32x32xbf16>
    %76 = vector.shape_cast %75 : vector<1x32x32xbf16> to vector<32x32xbf16>
    %cst_43 = arith.constant dense<0.000000e+00> : vector<32x32xf32>
    %77 = tpu.matmul %49, %76, %cst_43 {dimension_numbers = #tpu.dot_dimension_numbers<[1], [0], [0], [1], [0, 0, 1, 1], [], []>} : vector<32x32xbf16>, vector<32x32xbf16>, vector<32x32xf32> -> vector<32x32xf32>
    %78 = vector.shape_cast %77 : vector<32x32xf32> to vector<4x8x32xf32>
    %79 = arith.truncf %78 : vector<4x8x32xf32> to vector<4x8x32xbf16>
    %80 = arith.truncf %31 : vector<4x8x8xf32> to vector<4x8x8xbf16>
    "tpu.trace_start"() <{level = 10 : i32, message = "bij,bjf->bif"}> : () -> ()
    %cst_44 = arith.constant dense<0.000000e+00> : vector<4x8x32xf32>
    %81 = tpu.matmul %80, %79, %cst_44 {dimension_numbers = #tpu.dot_dimension_numbers<[2], [1], [1], [2], [0, 0, 0, 1, 1, 2], [0], [0]>} : vector<4x8x8xbf16>, vector<4x8x32xbf16>, vector<4x8x32xf32> -> vector<4x8x32xf32>
    "tpu.trace_stop"() : () -> ()
    %82 = vector.shape_cast %53 : vector<1x32xf32> to vector<1x1x32xf32>
    %83 = vector.broadcast %82 : vector<1x1x32xf32> to vector<4x8x32xf32>
    %84 = arith.addf %81, %83 : vector<4x8x32xf32>
    %cst_45 = arith.constant 0.000000e+00 : f32
    %85 = vector.broadcast %cst_45 : f32 to vector<4x8x32xf32>
    %86 = arith.maximumf %84, %85 : vector<4x8x32xf32>
    %cst_46 = arith.constant dense<0.000000e+00> : vector<4x8xf32>
    %87 = vector.multi_reduction <add>, %15, %cst_46 [1] : vector<4x8x8xf32> to vector<4x8xf32>
    %88 = vector.shape_cast %87 : vector<4x8xf32> to vector<4x1x8xf32>
    %cst_47 = arith.constant 8.000000e+00 : f32
    %89 = vector.broadcast %cst_47 : f32 to vector<4x1x8xf32>
    %90 = arith.divf %88, %89 : vector<4x1x8xf32>
    %cst_48 = arith.constant dense<0.000000e+00> : vector<4x8xf32>
    %91 = vector.multi_reduction <add>, %47, %cst_48 [1] : vector<4x8x8xf32> to vector<4x8xf32>
    %92 = vector.shape_cast %91 : vector<4x8xf32> to vector<4x1x8xf32>
    %cst_49 = arith.constant 8.000000e+00 : f32
    %93 = vector.broadcast %cst_49 : f32 to vector<4x1x8xf32>
    %94 = arith.divf %92, %93 : vector<4x1x8xf32>
    %cst_50 = arith.constant dense<0.000000e+00> : vector<4x8xf32>
    %95 = vector.multi_reduction <add>, %31, %cst_50 [1] : vector<4x8x8xf32> to vector<4x8xf32>
    %96 = vector.shape_cast %95 : vector<4x8xf32> to vector<4x1x8xf32>
    %cst_51 = arith.constant 8.000000e+00 : f32
    %97 = vector.broadcast %cst_51 : f32 to vector<4x1x8xf32>
    %98 = arith.divf %96, %97 : vector<4x1x8xf32>
    %99 = arith.truncf %90 : vector<4x1x8xf32> to vector<4x1x8xbf16>
    %100 = arith.truncf %74 : vector<4x8x32xf32> to vector<4x8x32xbf16>
    "tpu.trace_start"() <{level = 10 : i32, message = "bij,bjf->bif"}> : () -> ()
    %cst_52 = arith.constant dense<0.000000e+00> : vector<4x1x32xf32>
    %101 = tpu.matmul %99, %100, %cst_52 {dimension_numbers = #tpu.dot_dimension_numbers<[2], [1], [1], [2], [0, 0, 0, 1, 1, 2], [0], [0]>} : vector<4x1x8xbf16>, vector<4x8x32xbf16>, vector<4x1x32xf32> -> vector<4x1x32xf32>
    "tpu.trace_stop"() : () -> ()
    %102 = vector.shape_cast %101 : vector<4x1x32xf32> to vector<4x32xf32>
    %103 = arith.truncf %102 : vector<4x32xf32> to vector<4x32xbf16>
    %c0_53 = arith.constant 0 : index
    %c0_54 = arith.constant 0 : index
    %c0_55 = arith.constant 0 : index
    %104 = vector.load %arg7[%c0_53, %c0_54, %c0_55] : memref<3x32x32xbf16, #tpu.memory_space<vmem>>, vector<1x32x32xbf16>
    %105 = vector.shape_cast %104 : vector<1x32x32xbf16> to vector<32x32xbf16>
    %cst_56 = arith.constant dense<0.000000e+00> : vector<4x32xf32>
    %106 = tpu.matmul %103, %105, %cst_56 {dimension_numbers = #tpu.dot_dimension_numbers<[1], [0], [0], [1], [0, 0, 1, 1], [], []>} : vector<4x32xbf16>, vector<32x32xbf16>, vector<4x32xf32> -> vector<4x32xf32>
    %107 = arith.truncf %94 : vector<4x1x8xf32> to vector<4x1x8xbf16>
    %108 = arith.truncf %86 : vector<4x8x32xf32> to vector<4x8x32xbf16>
    "tpu.trace_start"() <{level = 10 : i32, message = "bij,bjf->bif"}> : () -> ()
    %cst_57 = arith.constant dense<0.000000e+00> : vector<4x1x32xf32>
    %109 = tpu.matmul %107, %108, %cst_57 {dimension_numbers = #tpu.dot_dimension_numbers<[2], [1], [1], [2], [0, 0, 0, 1, 1, 2], [0], [0]>} : vector<4x1x8xbf16>, vector<4x8x32xbf16>, vector<4x1x32xf32> -> vector<4x1x32xf32>
    "tpu.trace_stop"() : () -> ()
    %110 = vector.shape_cast %109 : vector<4x1x32xf32> to vector<4x32xf32>
    %111 = arith.truncf %110 : vector<4x32xf32> to vector<4x32xbf16>
    %c1_58 = arith.constant 1 : index
    %c0_59 = arith.constant 0 : index
    %c0_60 = arith.constant 0 : index
    %112 = vector.load %arg7[%c1_58, %c0_59, %c0_60] : memref<3x32x32xbf16, #tpu.memory_space<vmem>>, vector<1x32x32xbf16>
    %113 = vector.shape_cast %112 : vector<1x32x32xbf16> to vector<32x32xbf16>
    %cst_61 = arith.constant dense<0.000000e+00> : vector<4x32xf32>
    %114 = tpu.matmul %111, %113, %cst_61 {dimension_numbers = #tpu.dot_dimension_numbers<[1], [0], [0], [1], [0, 0, 1, 1], [], []>} : vector<4x32xbf16>, vector<32x32xbf16>, vector<4x32xf32> -> vector<4x32xf32>
    %115 = arith.addf %106, %114 : vector<4x32xf32>
    %116 = arith.truncf %98 : vector<4x1x8xf32> to vector<4x1x8xbf16>
    %117 = arith.truncf %74 : vector<4x8x32xf32> to vector<4x8x32xbf16>
    "tpu.trace_start"() <{level = 10 : i32, message = "bij,bjf->bif"}> : () -> ()
    %cst_62 = arith.constant dense<0.000000e+00> : vector<4x1x32xf32>
    %118 = tpu.matmul %116, %117, %cst_62 {dimension_numbers = #tpu.dot_dimension_numbers<[2], [1], [1], [2], [0, 0, 0, 1, 1, 2], [0], [0]>} : vector<4x1x8xbf16>, vector<4x8x32xbf16>, vector<4x1x32xf32> -> vector<4x1x32xf32>
    "tpu.trace_stop"() : () -> ()
    %119 = vector.shape_cast %118 : vector<4x1x32xf32> to vector<4x32xf32>
    %120 = arith.truncf %119 : vector<4x32xf32> to vector<4x32xbf16>
    %c2_63 = arith.constant 2 : index
    %c0_64 = arith.constant 0 : index
    %c0_65 = arith.constant 0 : index
    %121 = vector.load %arg7[%c2_63, %c0_64, %c0_65] : memref<3x32x32xbf16, #tpu.memory_space<vmem>>, vector<1x32x32xbf16>
    %122 = vector.shape_cast %121 : vector<1x32x32xbf16> to vector<32x32xbf16>
    %cst_66 = arith.constant dense<0.000000e+00> : vector<4x32xf32>
    %123 = tpu.matmul %120, %122, %cst_66 {dimension_numbers = #tpu.dot_dimension_numbers<[1], [0], [0], [1], [0, 0, 1, 1], [], []>} : vector<4x32xbf16>, vector<32x32xbf16>, vector<4x32xf32> -> vector<4x32xf32>
    %124 = arith.addf %115, %123 : vector<4x32xf32>
    %125 = vector.broadcast %54 : vector<1x32xf32> to vector<4x32xf32>
    %126 = arith.addf %124, %125 : vector<4x32xf32>
    %cst_67 = arith.constant 0.000000e+00 : f32
    %127 = vector.broadcast %cst_67 : f32 to vector<4x32xf32>
    %128 = arith.maximumf %126, %127 : vector<4x32xf32>
    %129 = math.absf %128 : vector<4x32xf32>
    %cst_68 = arith.constant dense<0.000000e+00> : vector<4xf32>
    %130 = vector.multi_reduction <add>, %129, %cst_68 [1] : vector<4x32xf32> to vector<4xf32>
    %131 = vector.shape_cast %130 : vector<4xf32> to vector<4x1xf32>
    %cst_69 = arith.constant 9.99999996E-13 : f32
    %132 = vector.broadcast %cst_69 : f32 to vector<4x1xf32>
    %133 = arith.maximumf %131, %132 : vector<4x1xf32>
    %134 = tpu.reciprocal %133 {approx = true} : vector<4x1xf32> -> vector<4x1xf32>
    %135 = vector.broadcast %134 : vector<4x1xf32> to vector<4x32xf32>
    %136 = arith.mulf %128, %135 : vector<4x32xf32>
    %137 = arith.negf %136 : vector<4x32xf32>
    %138 = math.exp %137 : vector<4x32xf32>
    %cst_70 = arith.constant 1.000000e+00 : f32
    %139 = vector.broadcast %cst_70 : f32 to vector<4x32xf32>
    %140 = arith.addf %139, %138 : vector<4x32xf32>
    %141 = arith.divf %139, %140 : vector<4x32xf32>
    %c0_71 = arith.constant 0 : index
    %c0_72 = arith.constant 0 : index
    %c0_73 = arith.constant 0 : index
    %142 = vector.load %arg12[%c0_71, %c0_72, %c0_73] : memref<1x4x32xf32, #tpu.memory_space<vmem>>, vector<1x4x32xf32>
    %143 = vector.shape_cast %142 : vector<1x4x32xf32> to vector<4x32xf32>
    %144 = vector.shape_cast %141 : vector<4x32xf32> to vector<1x4x32xf32>
    tpu.vector_store %arg12[%c0_71, %c0_72, %c0_73], %144 {strides = array<i32>} : memref<1x4x32xf32, #tpu.memory_space<vmem>>, vector<1x4x32xf32>,
    %c0_74 = arith.constant 0 : index
    %c0_75 = arith.constant 0 : index
    %145 = vector.load %arg9[%c0_74, %c0_75] : memref<32x4xf32, #tpu.memory_space<vmem>>, vector<32x4xf32>
    %cst_76 = arith.constant dense<0.000000e+00> : vector<4x4xf32>
    %146 = tpu.matmul %136, %145, %cst_76 {dimension_numbers = #tpu.dot_dimension_numbers<[1], [0], [0], [1], [0, 0, 1, 1], [], []>} : vector<4x32xf32>, vector<32x4xf32>, vector<4x4xf32> -> vector<4x4xf32>
    %c0_77 = arith.constant 0 : index
    %c0_78 = arith.constant 0 : index
    %147 = vector.load %arg10[%c0_77, %c0_78] : memref<1x4xf32, #tpu.memory_space<vmem>>, vector<1x4xf32>
    %148 = vector.broadcast %147 : vector<1x4xf32> to vector<4x4xf32>
    %149 = arith.addf %146, %148 : vector<4x4xf32>
    %c0_79 = arith.constant 0 : index
    %c0_80 = arith.constant 0 : index
    %c0_81 = arith.constant 0 : index
    %150 = vector.load %arg11[%c0_79, %c0_80, %c0_81] : memref<1x4x4xf32, #tpu.memory_space<vmem>>, vector<1x4x4xf32>
    %151 = vector.shape_cast %150 : vector<1x4x4xf32> to vector<4x4xf32>
    %152 = vector.shape_cast %149 : vector<4x4xf32> to vector<1x4x4xf32>
    tpu.vector_store %arg11[%c0_79, %c0_80, %c0_81], %152 {strides = array<i32>} : memref<1x4x4xf32, #tpu.memory_space<vmem>>, vector<1x4x4xf32>,
    return
  }
  func.func @transform_0(%arg0: i32) -> (i32, i32, i32) {
    %c0_i32 = arith.constant 0 : i32
    %c0_i32_0 = arith.constant 0 : i32
    %c0_i32_1 = arith.constant 0 : i32
    return %arg0, %c0_i32, %c0_i32_0 : i32, i32, i32
  }
  func.func @transform_1(%arg0: i32) -> (i32, i32, i32) {
    %c0_i32 = arith.constant 0 : i32
    %c0_i32_0 = arith.constant 0 : i32
    %c0_i32_1 = arith.constant 0 : i32
    return %arg0, %c0_i32, %c0_i32_0 : i32, i32, i32
  }
  func.func @transform_2(%arg0: i32) -> (i32, i32, i32) {
    %c0_i32 = arith.constant 0 : i32
    %c0_i32_0 = arith.constant 0 : i32
    %c0_i32_1 = arith.constant 0 : i32
    return %arg0, %c0_i32, %c0_i32_0 : i32, i32, i32
  }
  func.func @transform_3(%arg0: i32) -> (i32, i32, i32) {
    %c0_i32 = arith.constant 0 : i32
    %c0_i32_0 = arith.constant 0 : i32
    %c0_i32_1 = arith.constant 0 : i32
    return %arg0, %c0_i32, %c0_i32_0 : i32, i32, i32
  }
  func.func @transform_4(%arg0: i32) -> (i32, i32, i32) {
    %c0_i32 = arith.constant 0 : i32
    %c0_i32_0 = arith.constant 0 : i32
    %c0_i32_1 = arith.constant 0 : i32
    return %arg0, %c0_i32, %c0_i32_0 : i32, i32, i32
  }
  func.func @transform_5(%arg0: i32) -> (i32, i32, i32) {
    %c0_i32 = arith.constant 0 : i32
    %c0_i32_0 = arith.constant 0 : i32
    %c0_i32_1 = arith.constant 0 : i32
    %c0_i32_2 = arith.constant 0 : i32
    return %c0_i32, %c0_i32_0, %c0_i32_1 : i32, i32, i32
  }
  func.func @transform_6(%arg0: i32) -> (i32, i32, i32) {
    %c0_i32 = arith.constant 0 : i32
    %c0_i32_0 = arith.constant 0 : i32
    %c0_i32_1 = arith.constant 0 : i32
    %c0_i32_2 = arith.constant 0 : i32
    return %c0_i32, %c0_i32_0, %c0_i32_1 : i32, i32, i32
  }
  func.func @transform_7(%arg0: i32) -> (i32, i32) {
    %c0_i32 = arith.constant 0 : i32
    %c0_i32_0 = arith.constant 0 : i32
    %c0_i32_1 = arith.constant 0 : i32
    return %c0_i32, %c0_i32_0 : i32, i32
  }
  func.func @transform_8(%arg0: i32) -> (i32, i32) {
    %c0_i32 = arith.constant 0 : i32
    %c0_i32_0 = arith.constant 0 : i32
    %c0_i32_1 = arith.constant 0 : i32
    return %c0_i32, %c0_i32_0 : i32, i32
  }
  func.func @transform_9(%arg0: i32) -> (i32, i32) {
    %c0_i32 = arith.constant 0 : i32
    %c0_i32_0 = arith.constant 0 : i32
    %c0_i32_1 = arith.constant 0 : i32
    return %c0_i32, %c0_i32_0 : i32, i32
  }
  func.func @transform_10(%arg0: i32) -> (i32, i32, i32) {
    %c0_i32 = arith.constant 0 : i32
    %c0_i32_0 = arith.constant 0 : i32
    %c0_i32_1 = arith.constant 0 : i32
    return %arg0, %c0_i32, %c0_i32_0 : i32, i32, i32
  }
  func.func @transform_11(%arg0: i32) -> (i32, i32, i32) {
    %c0_i32 = arith.constant 0 : i32
    %c0_i32_0 = arith.constant 0 : i32
    %c0_i32_1 = arith.constant 0 : i32
    return %arg0, %c0_i32, %c0_i32_0 : i32, i32, i32
  }
}

</mosaic_0001>

<llo_original>
// kernel: tpu_custom_call.1
$region0: #{tpu_custom_call.1}
  #allocation0 [shape = 'u32[]', space=smem, size = 0x4, offset = 0x4, fixed_abs, tag = 'smem constant byte address 0x4 - core index']
  #allocation1 [shape = 'u32[72,128]{1,0:T(1,128)}', space=vmem, size = 0x9000, scoped, tag = 'internal scratch']
  %s0 = inlined_call_operand.vmem [shape: bf16[8,8,8], index: 0, kind: input, shape index: {}]
  %s1 = inlined_call_operand.hbm [shape: bf16[8,8,8], index: 1, kind: input, shape index: {}]
  %s2 = inlined_call_operand.hbm [shape: bf16[8,8,8], index: 2, kind: input, shape index: {}]
  %s3 = inlined_call_operand.hbm [shape: bf16[8,8,32], index: 3, kind: input, shape index: {}]
  %s4 = inlined_call_operand.hbm [shape: bf16[8,8,32], index: 4, kind: input, shape index: {}]
  %s5 = inlined_call_operand.hbm [shape: bf16[3,32,32], index: 5, kind: input, shape index: {}]
  %s6 = inlined_call_operand.hbm [shape: bf16[3,32,32], index: 6, kind: input, shape index: {}]
  %s7 = inlined_call_operand.vmem [shape: f32[3,32], index: 7, kind: input, shape index: {}]
  %s8 = inlined_call_operand.vmem [shape: f32[32,4], index: 8, kind: input, shape index: {}]
  %s9 = inlined_call_operand.vmem [shape: f32[1,4], index: 9, kind: input, shape index: {}]
  %s10 = inlined_call_operand.hbm [shape: f32[2,4,4], index: 10, kind: output, shape index: {0}]
  %s11 = inlined_call_operand.hbm [shape: f32[2,4,32], index: 11, kind: output, shape index: {1}]
  %12 = xla_tuple %s10, %s11
  %s13 = sld [smem:[#allocation0]]
  $region105: #{tpu_custom_call.1} parent=0
    _
  %s15 = ssub.s32 1, %s13
  %s16 = scalar_select 0, %s15, %s13
  $region1: #{tpu_custom_call.1} parent=0
    #allocation2 [shape = 'u8[16384]{0}', space=vmem, size = 0x4000, scoped, tag = 'input window, operand 1']
    #allocation3 [shape = 's32[2]{0}', space=sflag, size = 0x8, scoped, tag = 'scoped memory for tpu_custom_call.1']
    #allocation4 [shape = 's32[2]{0}', space=sflag, size = 0x8, scoped, tag = 'scoped memory for tpu_custom_call.1']
    #allocation5 [shape = 'u8[16384]{0}', space=vmem, size = 0x4000, scoped, tag = 'input window, operand 2']
    #allocation6 [shape = 's32[2]{0}', space=sflag, size = 0x8, scoped, tag = 'scoped memory for tpu_custom_call.1']
    #allocation7 [shape = 'u8[16384]{0}', space=vmem, size = 0x4000, scoped, tag = 'input window, operand 3']
    #allocation8 [shape = 'u8[16384]{0}', space=vmem, size = 0x4000, scoped, tag = 'input window, operand 4']
    #allocation9 [shape = 's32[2]{0}', space=sflag, size = 0x8, scoped, tag = 'scoped memory for tpu_custom_call.1']
    #allocation10 [shape = 'u8[24576]{0}', space=vmem, size = 0x6000, scoped, tag = 'input window, operand 5, single buffered']
    #allocation11 [shape = 'u8[24576]{0}', space=vmem, size = 0x6000, scoped, tag = 'input window, operand 6, single buffered']
    #allocation12 [shape = 's32[1]{0}', space=sflag, size = 0x4, scoped, tag = 'scoped memory for tpu_custom_call.1']
    #allocation13 [shape = 'u8[4096]{0}', space=vmem, size = 0x1000, scoped, tag = 'output window, operand 0']
    #allocation14 [shape = 'u8[4096]{0}', space=vmem, size = 0x1000, scoped, tag = 'output window, operand 1']
    #allocation15 [shape = 's32[2]{0}', space=sflag, size = 0x8, scoped, tag = 'scoped memory for tpu_custom_call.1']
    %17 = vsyncpa [#allocation3], 0
    %s18 = scalar_lea.sflag [#allocation3], 1
    %19 = vsyncpa %s18, 0
    %20 = vsyncpa [#allocation6], 0
    %s21 = scalar_lea.sflag [#allocation6], 1
    %22 = vsyncpa %s21, 0
    %23 = vsyncpa [#allocation9], 0
    %s24 = scalar_lea.sflag [#allocation9], 1
    %25 = vsyncpa %s24, 0
    %26 = vsyncpa [#allocation12], 0
    %27 = vsyncpa [#allocation4], 0
    %s28 = scalar_lea.sflag [#allocation4], 1
    %29 = vsyncpa %s28, 0
    %30 = vsyncpa [#allocation15], 0
    %s31 = scalar_lea.sflag [#allocation15], 1
    %32 = vsyncpa %s31, 0
    loop: start=0, step=1, limit=4
    $region2: #{tpu_custom_call.1} parent=1 // loop_pre_header
      _
    $region3: #{tpu_custom_call.1} parent=1 // loop_header
      %s34 = sphi 0, %s38
      %p35 = scmp.ge.s32.totalorder %s34, 4
      %s44 = sphi 0, %s46
      %s47 = sphi 0, %s44
      %s48 = sphi 0, %s47
      %s64 = sphi 0, %s48
      %s70 = sphi 0, %s72
      %s73 = sphi 0, %s70
      %s74 = sphi 0, %s73
      %s90 = sphi 0, %s74
      %s96 = sphi 0, %s98
      %s99 = sphi 0, %s96
      %s100 = sphi 0, %s99
      %s116 = sphi 0, %s100
      %s122 = sphi 0, %s124
      %s125 = sphi 0, %s122
      %s126 = sphi 0, %s125
      %s142 = sphi 0, %s126
      %s148 = sphi 0, %s150
      %s151 = sphi 0, %s148
      %s152 = sphi 0, %s151
      %s168 = sphi 0, %s152
      %s172 = sphi 0, %s172
      %s174 = sphi 0, %s172
      %s175 = sphi 0, %s174
      %s189 = sphi 0, %s175
      %s193 = sphi 0, %s193
      %s195 = sphi 0, %s193
      %s196 = sphi 0, %s195
      %s210 = sphi 0, %s196
      %s214 = sphi 0, %s214
      %s216 = sphi 0, %s214
      %s217 = sphi 0, %s216
      %s231 = sphi 0, %s217
      %s235 = sphi 0, %s235
      %s237 = sphi 0, %s235
      %s238 = sphi 0, %s237
      %s252 = sphi 0, %s238
      %s256 = sphi 0, %s256
      %s258 = sphi 0, %s256
      %s259 = sphi 0, %s258
      %s273 = sphi 0, %s259
      %s279 = sphi 0, %s281
      %s282 = sphi 0, %s279
      %s283 = sphi 0, %s282
      %s299 = sphi 0, %s283
      %s305 = sphi 0, %s307
      %s308 = sphi 0, %s305
      %s309 = sphi 0, %s308
      %s325 = sphi 0, %s309
    $region4: #{tpu_custom_call.1} parent=1 // loop_header_branch
      %37 = sbr.rel (%p35) target = $region8
    $region5: #{tpu_custom_call.1} parent=1 // loop_body
      %s39 = ssub.s32 %s34, 1
      %s40 = ssub.s32 %s34, 2
      %s41 = sadd.s32 %s34, 1
      %s42 = ssub.s32 %s34, %s41
      %p43 = scmp.eq.s32.totalorder %s42, 0
      %s45 = sadd.s32 %s44, 1
      %s46 = scalar_select %p43, %s44, %s45
      %p49 = pneg %p43
      %p50 = scmp.eq.s32.totalorder %s34, 1
      %p51 = por %p49, %p50
      %p52 = scmp.ne.s32.totalorder %s44, %s47
      %p53 = scmp.eq.s32.totalorder %s34, 0
      %p54 = por %p52, %p53
      %p55 = scmp.ne.s32.totalorder %s44, %s47
      %p56 = scmp.eq.s32.totalorder %s39, 1
      %p57 = por %p55, %p56
      %p58 = scmp.ne.s32.totalorder %s47, %s48
      %p59 = scmp.eq.s32.totalorder %s39, 0
      %p60 = por %p58, %p59
      %p61 = scmp.ne.s32.totalorder %s47, %s48
      %p62 = scmp.eq.s32.totalorder %s40, 1
      %p63 = por %p61, %p62
      %p65 = scmp.ne.s32.totalorder %s48, %s64
      %p66 = scmp.eq.s32.totalorder %s40, 0
      %p67 = por %p65, %p66
      %s68 = ssub.s32 %s34, %s41
      %p69 = scmp.eq.s32.totalorder %s68, 0
      %s71 = sadd.s32 %s70, 1
      %s72 = scalar_select %p69, %s70, %s71
      %p75 = pneg %p69
      %p76 = scmp.eq.s32.totalorder %s34, 1
      %p77 = por %p75, %p76
      %p78 = scmp.ne.s32.totalorder %s70, %s73
      %p79 = scmp.eq.s32.totalorder %s34, 0
      %p80 = por %p78, %p79
      %p81 = scmp.ne.s32.totalorder %s70, %s73
      %p82 = scmp.eq.s32.totalorder %s39, 1
      %p83 = por %p81, %p82
      %p84 = scmp.ne.s32.totalorder %s73, %s74
      %p85 = scmp.eq.s32.totalorder %s39, 0
      %p86 = por %p84, %p85
      %p87 = scmp.ne.s32.totalorder %s73, %s74
      %p88 = scmp.eq.s32.totalorder %s40, 1
      %p89 = por %p87, %p88
      %p91 = scmp.ne.s32.totalorder %s74, %s90
      %p92 = scmp.eq.s32.totalorder %s40, 0
      %p93 = por %p91, %p92
      %s94 = ssub.s32 %s34, %s41
      %p95 = scmp.eq.s32.totalorder %s94, 0
      %s97 = sadd.s32 %s96, 1
      %s98 = scalar_select %p95, %s96, %s97
      %p101 = pneg %p95
      %p102 = scmp.eq.s32.totalorder %s34, 1
      %p103 = por %p101, %p102
      %p104 = scmp.ne.s32.totalorder %s96, %s99
      %p105 = scmp.eq.s32.totalorder %s34, 0
      %p106 = por %p104, %p105
      %p107 = scmp.ne.s32.totalorder %s96, %s99
      %p108 = scmp.eq.s32.totalorder %s39, 1
      %p109 = por %p107, %p108
      %p110 = scmp.ne.s32.totalorder %s99, %s100
      %p111 = scmp.eq.s32.totalorder %s39, 0
      %p112 = por %p110, %p111
      %p113 = scmp.ne.s32.totalorder %s99, %s100
      %p114 = scmp.eq.s32.totalorder %s40, 1
      %p115 = por %p113, %p114
      %p117 = scmp.ne.s32.totalorder %s100, %s116
      %p118 = scmp.eq.s32.totalorder %s40, 0
      %p119 = por %p117, %p118
      %s120 = ssub.s32 %s34, %s41
      %p121 = scmp.eq.s32.totalorder %s120, 0
      %s123 = sadd.s32 %s122, 1
      %s124 = scalar_select %p121, %s122, %s123
      %p127 = pneg %p121
      %p128 = scmp.eq.s32.totalorder %s34, 1
      %p129 = por %p127, %p128
      %p130 = scmp.ne.s32.totalorder %s122, %s125
      %p131 = scmp.eq.s32.totalorder %s34, 0
      %p132 = por %p130, %p131
      %p133 = scmp.ne.s32.totalorder %s122, %s125
      %p134 = scmp.eq.s32.totalorder %s39, 1
      %p135 = por %p133, %p134
      %p136 = scmp.ne.s32.totalorder %s125, %s126
      %p137 = scmp.eq.s32.totalorder %s39, 0
      %p138 = por %p136, %p137
      %p139 = scmp.ne.s32.totalorder %s125, %s126
      %p140 = scmp.eq.s32.totalorder %s40, 1
      %p141 = por %p139, %p140
      %p143 = scmp.ne.s32.totalorder %s126, %s142
      %p144 = scmp.eq.s32.totalorder %s40, 0
      %p145 = por %p143, %p144
      %s146 = ssub.s32 %s34, %s41
      %p147 = scmp.eq.s32.totalorder %s146, 0
      %s149 = sadd.s32 %s148, 1
      %s150 = scalar_select %p147, %s148, %s149
      %p153 = pneg %p147
      %p154 = scmp.eq.s32.totalorder %s34, 1
      %p155 = por %p153, %p154
      %p156 = scmp.ne.s32.totalorder %s148, %s151
      %p157 = scmp.eq.s32.totalorder %s34, 0
      %p158 = por %p156, %p157
      %p159 = scmp.ne.s32.totalorder %s148, %s151
      %p160 = scmp.eq.s32.totalorder %s39, 1
      %p161 = por %p159, %p160
      %p162 = scmp.ne.s32.totalorder %s151, %s152
      %p163 = scmp.eq.s32.totalorder %s39, 0
      %p164 = por %p162, %p163
      %p165 = scmp.ne.s32.totalorder %s151, %s152
      %p166 = scmp.eq.s32.totalorder %s40, 1
      %p167 = por %p165, %p166
      %p169 = scmp.ne.s32.totalorder %s152, %s168
      %p170 = scmp.eq.s32.totalorder %s40, 0
      %p171 = por %p169, %p170
      %s173 = sadd.s32 %s172, 1
      %p176 = scmp.eq.s32.totalorder %s34, 1
      %p177 = scmp.ne.s32.totalorder %s172, %s174
      %p178 = scmp.eq.s32.totalorder %s34, 0
      %p179 = por %p177, %p178
      %p180 = scmp.ne.s32.totalorder %s172, %s174
      %p181 = scmp.eq.s32.totalorder %s39, 1
      %p182 = por %p180, %p181
      %p183 = scmp.ne.s32.totalorder %s174, %s175
      %p184 = scmp.eq.s32.totalorder %s39, 0
      %p185 = por %p183, %p184
      %p186 = scmp.ne.s32.totalorder %s174, %s175
      %p187 = scmp.eq.s32.totalorder %s40, 1
      %p188 = por %p186, %p187
      %p190 = scmp.ne.s32.totalorder %s175, %s189
      %p191 = scmp.eq.s32.totalorder %s40, 0
      %p192 = por %p190, %p191
      %s194 = sadd.s32 %s193, 1
      %p197 = scmp.eq.s32.totalorder %s34, 1
      %p198 = scmp.ne.s32.totalorder %s193, %s195
      %p199 = scmp.eq.s32.totalorder %s34, 0
      %p200 = por %p198, %p199
      %p201 = scmp.ne.s32.totalorder %s193, %s195
      %p202 = scmp.eq.s32.totalorder %s39, 1
      %p203 = por %p201, %p202
      %p204 = scmp.ne.s32.totalorder %s195, %s196
      %p205 = scmp.eq.s32.totalorder %s39, 0
      %p206 = por %p204, %p205
      %p207 = scmp.ne.s32.totalorder %s195, %s196
      %p208 = scmp.eq.s32.totalorder %s40, 1
      %p209 = por %p207, %p208
      %p211 = scmp.ne.s32.totalorder %s196, %s210
      %p212 = scmp.eq.s32.totalorder %s40, 0
      %p213 = por %p211, %p212
      %s215 = sadd.s32 %s214, 1
      %p218 = scmp.eq.s32.totalorder %s34, 1
      %p219 = scmp.ne.s32.totalorder %s214, %s216
      %p220 = scmp.eq.s32.totalorder %s34, 0
      %p221 = por %p219, %p220
      %p222 = scmp.ne.s32.totalorder %s214, %s216
      %p223 = scmp.eq.s32.totalorder %s39, 1
      %p224 = por %p222, %p223
      %p225 = scmp.ne.s32.totalorder %s216, %s217
      %p226 = scmp.eq.s32.totalorder %s39, 0
      %p227 = por %p225, %p226
      %p228 = scmp.ne.s32.totalorder %s216, %s217
      %p229 = scmp.eq.s32.totalorder %s40, 1
      %p230 = por %p228, %p229
      %p232 = scmp.ne.s32.totalorder %s217, %s231
      %p233 = scmp.eq.s32.totalorder %s40, 0
      %p234 = por %p232, %p233
      %s236 = sadd.s32 %s235, 1
      %p239 = scmp.eq.s32.totalorder %s34, 1
      %p240 = scmp.ne.s32.totalorder %s235, %s237
      %p241 = scmp.eq.s32.totalorder %s34, 0
      %p242 = por %p240, %p241
      %p243 = scmp.ne.s32.totalorder %s235, %s237
      %p244 = scmp.eq.s32.totalorder %s39, 1
      %p245 = por %p243, %p244
      %p246 = scmp.ne.s32.totalorder %s237, %s238
      %p247 = scmp.eq.s32.totalorder %s39, 0
      %p248 = por %p246, %p247
      %p249 = scmp.ne.s32.totalorder %s237, %s238
      %p250 = scmp.eq.s32.totalorder %s40, 1
      %p251 = por %p249, %p250
      %p253 = scmp.ne.s32.totalorder %s238, %s252
      %p254 = scmp.eq.s32.totalorder %s40, 0
      %p255 = por %p253, %p254
      %s257 = sadd.s32 %s256, 1
      %p260 = scmp.eq.s32.totalorder %s34, 1
      %p261 = scmp.ne.s32.totalorder %s256, %s258
      %p262 = scmp.eq.s32.totalorder %s34, 0
      %p263 = por %p261, %p262
      %p264 = scmp.ne.s32.totalorder %s256, %s258
      %p265 = scmp.eq.s32.totalorder %s39, 1
      %p266 = por %p264, %p265
      %p267 = scmp.ne.s32.totalorder %s258, %s259
      %p268 = scmp.eq.s32.totalorder %s39, 0
      %p269 = por %p267, %p268
      %p270 = scmp.ne.s32.totalorder %s258, %s259
      %p271 = scmp.eq.s32.totalorder %s40, 1
      %p272 = por %p270, %p271
      %p274 = scmp.ne.s32.totalorder %s259, %s273
      %p275 = scmp.eq.s32.totalorder %s40, 0
      %p276 = por %p274, %p275
      %s277 = ssub.s32 %s34, %s41
      %p278 = scmp.eq.s32.totalorder %s277, 0
      %s280 = sadd.s32 %s279, 1
      %s281 = scalar_select %p278, %s279, %s280
      %p284 = pneg %p278
      %p285 = scmp.eq.s32.totalorder %s34, 1
      %p286 = por %p284, %p285
      %p287 = scmp.ne.s32.totalorder %s279, %s282
      %p288 = scmp.eq.s32.totalorder %s34, 0
      %p289 = por %p287, %p288
      %p290 = scmp.ne.s32.totalorder %s279, %s282
      %p291 = scmp.eq.s32.totalorder %s39, 1
      %p292 = por %p290, %p291
      %p293 = scmp.ne.s32.totalorder %s282, %s283
      %p294 = scmp.eq.s32.totalorder %s39, 0
      %p295 = por %p293, %p294
      %p296 = scmp.ne.s32.totalorder %s282, %s283
      %p297 = scmp.eq.s32.totalorder %s40, 1
      %p298 = por %p296, %p297
      %p300 = scmp.ne.s32.totalorder %s283, %s299
      %p301 = scmp.eq.s32.totalorder %s40, 0
      %p302 = por %p300, %p301
      %s303 = ssub.s32 %s34, %s41
      %p304 = scmp.eq.s32.totalorder %s303, 0
      %s306 = sadd.s32 %s305, 1
      %s307 = scalar_select %p304, %s305, %s306
      %p310 = pneg %p304
      %p311 = scmp.eq.s32.totalorder %s34, 1
      %p312 = por %p310, %p311
      %p313 = scmp.ne.s32.totalorder %s305, %s308
      %p314 = scmp.eq.s32.totalorder %s34, 0
      %p315 = por %p313, %p314
      %p316 = scmp.ne.s32.totalorder %s305, %s308
      %p317 = scmp.eq.s32.totalorder %s39, 1
      %p318 = por %p316, %p317
      %p319 = scmp.ne.s32.totalorder %s308, %s309
      %p320 = scmp.eq.s32.totalorder %s39, 0
      %p321 = por %p319, %p320
      %p322 = scmp.ne.s32.totalorder %s308, %s309
      %p323 = scmp.eq.s32.totalorder %s40, 1
      %p324 = por %p322, %p323
      %p326 = scmp.ne.s32.totalorder %s309, %s325
      %p327 = scmp.eq.s32.totalorder %s40, 0
      %p328 = por %p326, %p327
      %p329 = scmp.le.s32.totalorder 1, %s34
      %p330 = scmp.lt.s32.totalorder %s34, 3
      %p331 = pnand %p329, %p330
      %p332 = pneg %p331
      // Predicated region
      $region9: #{tpu_custom_call.1} parent=5 // pred_check
        _
      $region10: #{tpu_custom_call.1} parent=5 // pred_check_branch
        %334 = sbr.rel (%p331) target = $region12
      $region11: #{tpu_custom_call.1} parent=5 // pred_region
        %s335 = ssub.s32 %s34, 1
        // Predicated region
        $region13: #{tpu_custom_call.1} parent=11 // pred_check
          %p336 = pneg %p185
        $region14: #{tpu_custom_call.1} parent=11 // pred_check_branch
          %338 = sbr.rel (%p336) target = $region16
        $region15: #{tpu_custom_call.1} parent=11 // pred_region
          %340 = vsyncadd [#allocation9], 0
          %s341 = sshll.u32 %s5, 4
          %s342 = int_to_ptr.hbm [resolvable:$true] %s341
          %s343 = sshll.u32 [#allocation10], 4
          %s344 = int_to_ptr.vmem [resolvable:$true] %s343
          %349 = dma.hbm_to_vmem [thread:$0]  %s342, 768, %s344, [#allocation9], 64, 64, 4
        $region16: #{tpu_custom_call.1} parent=11 // pred_fallthru
          _
        // Predicated region
        $region17: #{tpu_custom_call.1} parent=11 // pred_check
          %p350 = pneg %p206
        $region18: #{tpu_custom_call.1} parent=11 // pred_check_branch
          %352 = sbr.rel (%p350) target = $region20
        $region19: #{tpu_custom_call.1} parent=11 // pred_region
          %354 = vsyncadd [#allocation12], 0
          %s355 = sshll.u32 %s6, 4
          %s356 = int_to_ptr.hbm [resolvable:$true] %s355
          %s357 = sshll.u32 [#allocation11], 4
          %s358 = int_to_ptr.vmem [resolvable:$true] %s357
          %363 = dma.hbm_to_vmem [thread:$0]  %s356, 768, %s358, [#allocation12], 64, 64, 4
        $region20: #{tpu_custom_call.1} parent=11 // pred_fallthru
          _
        // Predicated region
        $region21: #{tpu_custom_call.1} parent=11 // pred_check
          %p364 = pneg %p227
        $region22: #{tpu_custom_call.1} parent=11 // pred_check_branch
          %366 = sbr.rel (%p364) target = $region24
        $region23: #{tpu_custom_call.1} parent=11 // pred_region
          _
        $region24: #{tpu_custom_call.1} parent=11 // pred_fallthru
          _
        // Predicated region
        $region25: #{tpu_custom_call.1} parent=11 // pred_check
          %p367 = pneg %p248
        $region26: #{tpu_custom_call.1} parent=11 // pred_check_branch
          %369 = sbr.rel (%p367) target = $region28
        $region27: #{tpu_custom_call.1} parent=11 // pred_region
          _
        $region28: #{tpu_custom_call.1} parent=11 // pred_fallthru
          _
        // Predicated region
        $region29: #{tpu_custom_call.1} parent=11 // pred_check
          %p370 = pneg %p269
        $region30: #{tpu_custom_call.1} parent=11 // pred_check_branch
          %372 = sbr.rel (%p370) target = $region32
        $region31: #{tpu_custom_call.1} parent=11 // pred_region
          _
        $region32: #{tpu_custom_call.1} parent=11 // pred_fallthru
          _
      $region12: #{tpu_custom_call.1} parent=5 // pred_fallthru
        _
      %p373 = scmp.lt.s32.totalorder %s34, 2
      // Predicated region
      $region33: #{tpu_custom_call.1} parent=5 // pred_check
        %p374 = pneg %p373
      $region34: #{tpu_custom_call.1} parent=5 // pred_check_branch
        %376 = sbr.rel (%p374) target = $region36
      $region35: #{tpu_custom_call.1} parent=5 // pred_region
        // Predicated region
        $region37: #{tpu_custom_call.1} parent=35 // pred_check
          %p377 = pneg %p54
        $region38: #{tpu_custom_call.1} parent=35 // pred_check_branch
          %379 = sbr.rel (%p377) target = $region40
        $region39: #{tpu_custom_call.1} parent=35 // pred_region
          %s380 = smul.u32 4, %s34
          %p381 = scmp.lt.s32.totalorder %s380, 7
          %s382 = scalar_select %p381, %s380, 7
          %s383 = smul.addr %s382, 4
          %s384 = scalar_lea.vmem %s0, %s383
          %s385 = smul.u32 4, %s34
        $region40: #{tpu_custom_call.1} parent=35 // pred_fallthru
          _
        // Predicated region
        $region41: #{tpu_custom_call.1} parent=35 // pred_check
          %p386 = pneg %p80
        $region42: #{tpu_custom_call.1} parent=35 // pred_check_branch
          %388 = sbr.rel (%p386) target = $region44
        $region43: #{tpu_custom_call.1} parent=35 // pred_region
          %s389 = sand.u32 %s70, 1
          %s390 = scalar_lea.sflag [#allocation3], %s389
          %s391 = sand.u32 %s70, 1
          %s392 = smul.addr %s391, 16
          %s393 = scalar_lea.vmem [#allocation2], %s392
          %s394 = smul.u32 4, %s34
          %396 = vsyncadd %s390, 0
          %s397 = smul.addr %s394, 4
          %s398 = scalar_lea.hbm %s1, %s397
          %s399 = sshll.u32 %s398, 4
          %s400 = int_to_ptr.hbm [resolvable:$true] %s399
          %s401 = sshll.u32 %s393, 4
          %s402 = int_to_ptr.vmem [resolvable:$true] %s401
          %407 = dma.hbm_to_vmem [thread:$0]  %s400, 256, %s402, %s390, 64, 64, 4
        $region44: #{tpu_custom_call.1} parent=35 // pred_fallthru
          _
        // Predicated region
        $region45: #{tpu_custom_call.1} parent=35 // pred_check
          %p408 = pneg %p106
        $region46: #{tpu_custom_call.1} parent=35 // pred_check_branch
          %410 = sbr.rel (%p408) target = $region48
        $region47: #{tpu_custom_call.1} parent=35 // pred_region
          %s411 = sand.u32 %s34, 1
          %s412 = scalar_lea.sflag [#allocation6], %s411
          %s413 = sand.u32 %s96, 1
          %s414 = smul.addr %s413, 16
          %s415 = scalar_lea.vmem [#allocation5], %s414
          %s416 = smul.u32 4, %s34
          %418 = vsyncadd %s412, 0
          %s419 = smul.addr %s416, 4
          %s420 = scalar_lea.hbm %s2, %s419
          %s421 = sshll.u32 %s420, 4
          %s422 = int_to_ptr.hbm [resolvable:$true] %s421
          %s423 = sshll.u32 %s415, 4
          %s424 = int_to_ptr.vmem [resolvable:$true] %s423
          %429 = dma.hbm_to_vmem [thread:$0]  %s422, 256, %s424, %s412, 64, 64, 4
        $region48: #{tpu_custom_call.1} parent=35 // pred_fallthru
          _
        // Predicated region
        $region49: #{tpu_custom_call.1} parent=35 // pred_check
          %p430 = pneg %p132
        $region50: #{tpu_custom_call.1} parent=35 // pred_check_branch
          %432 = sbr.rel (%p430) target = $region52
        $region51: #{tpu_custom_call.1} parent=35 // pred_region
          %s433 = sand.u32 %s34, 1
          %s434 = scalar_lea.sflag [#allocation6], %s433
          %s435 = sand.u32 %s122, 1
          %s436 = smul.addr %s435, 16
          %s437 = scalar_lea.vmem [#allocation7], %s436
          %s438 = smul.u32 4, %s34
          %440 = vsyncadd %s434, 0
          %s441 = smul.addr %s438, 4
          %s442 = scalar_lea.hbm %s3, %s441
          %s443 = sshll.u32 %s442, 4
          %s444 = int_to_ptr.hbm [resolvable:$true] %s443
          %s445 = sshll.u32 %s437, 4
          %s446 = int_to_ptr.vmem [resolvable:$true] %s445
          %451 = dma.hbm_to_vmem [thread:$0]  %s444, 256, %s446, %s434, 64, 64, 4
        $region52: #{tpu_custom_call.1} parent=35 // pred_fallthru
          _
        // Predicated region
        $region53: #{tpu_custom_call.1} parent=35 // pred_check
          %p452 = pneg %p158
        $region54: #{tpu_custom_call.1} parent=35 // pred_check_branch
          %454 = sbr.rel (%p452) target = $region56
        $region55: #{tpu_custom_call.1} parent=35 // pred_region
          %s455 = sand.u32 %s34, 1
          %s456 = scalar_lea.sflag [#allocation9], %s455
          %s457 = sand.u32 %s148, 1
          %s458 = smul.addr %s457, 16
          %s459 = scalar_lea.vmem [#allocation8], %s458
          %s460 = smul.u32 4, %s34
          %462 = vsyncadd %s456, 0
          %s463 = smul.addr %s460, 4
          %s464 = scalar_lea.hbm %s4, %s463
          %s465 = sshll.u32 %s464, 4
          %s466 = int_to_ptr.hbm [resolvable:$true] %s465
          %s467 = sshll.u32 %s459, 4
          %s468 = int_to_ptr.vmem [resolvable:$true] %s467
          %473 = dma.hbm_to_vmem [thread:$0]  %s466, 256, %s468, %s456, 64, 64, 4
        $region56: #{tpu_custom_call.1} parent=35 // pred_fallthru
          _
      $region36: #{tpu_custom_call.1} parent=5 // pred_fallthru
        _
      %p474 = scmp.le.s32.totalorder 1, %s34
      %p475 = scmp.lt.s32.totalorder %s34, 3
      %p476 = pnand %p474, %p475
      %p477 = pneg %p476
      // Predicated region
      $region57: #{tpu_custom_call.1} parent=5 // pred_check
        _
      $region58: #{tpu_custom_call.1} parent=5 // pred_check_branch
        %479 = sbr.rel (%p476) target = $region60
      $region59: #{tpu_custom_call.1} parent=5 // pred_region
        %s480 = ssub.s32 %s34, 1
        %s481 = sand.u32 %s73, 1
        %s482 = scalar_lea.sflag [#allocation3], %s481
        %s483 = sand.u32 %s73, 1
        %s484 = smul.addr %s483, 16
        %s485 = scalar_lea.vmem [#allocation2], %s484
        // Predicated region
        $region61: #{tpu_custom_call.1} parent=59 // pred_check
          %p486 = pneg %p86
        $region62: #{tpu_custom_call.1} parent=59 // pred_check_branch
          %488 = sbr.rel (%p486) target = $region64
        $region63: #{tpu_custom_call.1} parent=59 // pred_region
          %490 = dma.done %s482, 256
        $region64: #{tpu_custom_call.1} parent=59 // pred_fallthru
          _
        %s491 = sand.u32 %s39, 1
        %s492 = scalar_lea.sflag [#allocation6], %s491
        %s493 = sand.u32 %s99, 1
        %s494 = smul.addr %s493, 16
        %s495 = scalar_lea.vmem [#allocation5], %s494
        // Predicated region
        $region65: #{tpu_custom_call.1} parent=59 // pred_check
          %p496 = pneg %p112
        $region66: #{tpu_custom_call.1} parent=59 // pred_check_branch
          %498 = sbr.rel (%p496) target = $region68
        $region67: #{tpu_custom_call.1} parent=59 // pred_region
          %500 = dma.done %s492, 256
        $region68: #{tpu_custom_call.1} parent=59 // pred_fallthru
          _
        %s501 = sand.u32 %s39, 1
        %s502 = scalar_lea.sflag [#allocation6], %s501
        %s503 = sand.u32 %s125, 1
        %s504 = smul.addr %s503, 16
        %s505 = scalar_lea.vmem [#allocation7], %s504
        // Predicated region
        $region69: #{tpu_custom_call.1} parent=59 // pred_check
          %p506 = pneg %p138
        $region70: #{tpu_custom_call.1} parent=59 // pred_check_branch
          %508 = sbr.rel (%p506) target = $region72
        $region71: #{tpu_custom_call.1} parent=59 // pred_region
          %510 = dma.done %s502, 256
        $region72: #{tpu_custom_call.1} parent=59 // pred_fallthru
          _
        %s511 = sand.u32 %s39, 1
        %s512 = scalar_lea.sflag [#allocation9], %s511
        %s513 = sand.u32 %s151, 1
        %s514 = smul.addr %s513, 16
        %s515 = scalar_lea.vmem [#allocation8], %s514
        // Predicated region
        $region73: #{tpu_custom_call.1} parent=59 // pred_check
          %p516 = pneg %p164
        $region74: #{tpu_custom_call.1} parent=59 // pred_check_branch
          %518 = sbr.rel (%p516) target = $region76
        $region75: #{tpu_custom_call.1} parent=59 // pred_region
          %520 = dma.done %s512, 256
        $region76: #{tpu_custom_call.1} parent=59 // pred_fallthru
          _
        // Predicated region
        $region77: #{tpu_custom_call.1} parent=59 // pred_check
          %p521 = pneg %p185
        $region78: #{tpu_custom_call.1} parent=59 // pred_check_branch
          %523 = sbr.rel (%p521) target = $region80
        $region79: #{tpu_custom_call.1} parent=59 // pred_region
          %525 = dma.done [#allocation9], 768
        $region80: #{tpu_custom_call.1} parent=59 // pred_fallthru
          _
        // Predicated region
        $region81: #{tpu_custom_call.1} parent=59 // pred_check
          %p526 = pneg %p206
        $region82: #{tpu_custom_call.1} parent=59 // pred_check_branch
          %528 = sbr.rel (%p526) target = $region84
        $region83: #{tpu_custom_call.1} parent=59 // pred_region
          %530 = dma.done [#allocation12], 768
        $region84: #{tpu_custom_call.1} parent=59 // pred_fallthru
          _
        %s531 = smul.u32 4, %s39
        %p532 = scmp.lt.s32.totalorder %s531, 7
        %s533 = scalar_select %p532, %s531, 7
        %s534 = smul.addr %s533, 4
        %s535 = scalar_lea.vmem %s0, %s534
        %p536 = pneg %p60
        %p537 = pneg %p57
        %s538 = sand.u32 %s73, 1
        %s539 = scalar_lea.sflag [#allocation3], %s538
        %s540 = sand.u32 %s73, 1
        %s541 = smul.addr %s540, 16
        %s542 = scalar_lea.vmem [#allocation2], %s541
        %p543 = pneg %p86
        %p544 = pneg %p83
        %s545 = sand.u32 %s39, 1
        %s546 = scalar_lea.sflag [#allocation6], %s545
        %s547 = sand.u32 %s99, 1
        %s548 = smul.addr %s547, 16
        %s549 = scalar_lea.vmem [#allocation5], %s548
        %p550 = pneg %p112
        %p551 = pneg %p109
        %s552 = sand.u32 %s39, 1
        %s553 = scalar_lea.sflag [#allocation6], %s552
        %s554 = sand.u32 %s125, 1
        %s555 = smul.addr %s554, 16
        %s556 = scalar_lea.vmem [#allocation7], %s555
        %p557 = pneg %p138
        %p558 = pneg %p135
        %s559 = sand.u32 %s39, 1
        %s560 = scalar_lea.sflag [#allocation9], %s559
        %s561 = sand.u32 %s151, 1
        %s562 = smul.addr %s561, 16
        %s563 = scalar_lea.vmem [#allocation8], %s562
        %p564 = pneg %p164
        %p565 = pneg %p161
        %p566 = pneg %p185
        %p567 = pneg %p182
        %p568 = pneg %p206
        %p569 = pneg %p203
        %p570 = pneg %p227
        %p571 = pneg %p224
        %p572 = pneg %p248
        %p573 = pneg %p245
        %p574 = pneg %p269
        %p575 = pneg %p266
        %p576 = pneg %p295
        %p577 = pneg %p292
        %s578 = sand.u32 %s282, 1
        %s579 = scalar_lea.sflag [#allocation4], %s578
        %s580 = sand.u32 %s282, 1
        %s581 = smul.addr %s580, 4
        %s582 = scalar_lea.vmem [#allocation13], %s581
        %p583 = pneg %p321
        %p584 = pneg %p318
        %s585 = sand.u32 %s308, 1
        %s586 = scalar_lea.sflag [#allocation15], %s585
        %s587 = sand.u32 %s308, 1
        %s588 = smul.addr %s587, 4
        %s589 = scalar_lea.vmem [#allocation14], %s588
        %s590 = smul.u32 4, %s39
        %p591 = scmp.lt.s32.totalorder %s590, 7
        %s592 = scalar_select %p591, %s590, 7
        %s593 = smul.addr %s592, 4
        %s594 = scalar_lea.vmem %s0, %s593
        %s595 = smul.u32 4, %s39
        %s596 = smul.u32 4, %s39
        %s597 = smul.u32 4, %s39
        %s598 = smul.u32 4, %s39
        %s599 = smul.u32 4, %s39
        %v601 = vld [vmem:[%s594] sm:$0xf]
        %v602 = vld [vmem:[%s594 + $0x4] sm:$0xf]
        %v603 = vld [vmem:[%s594 + $0x8] sm:$0xf]
        %v604 = vld [vmem:[%s594 + $0xc] sm:$0xf]
        %v605 = vunpack.c.l.bf16 %v601
        %v606 = vunpack.c.l.bf16 %v602
        %v607 = vunpack.c.l.bf16 %v603
        %v608 = vunpack.c.l.bf16 %v604
        %vm609 = vcmask 64512
        %v610 = vsel %vm609, %v605, 0.0
        %611 = vadd.xlane.f32.xlu0 %v610
        %v612 = vpop.xlane.xlu0 %611
        %v613 = vsel %vm609, %v606, 0.0
        %614 = vadd.xlane.f32.xlu0 %v613
        %v615 = vpop.xlane.xlu0 %614
        %v616 = vsel %vm609, %v607, 0.0
        %617 = vadd.xlane.f32.xlu0 %v616
        %v618 = vpop.xlane.xlu0 %617
        %v619 = vsel %vm609, %v608, 0.0
        %620 = vadd.xlane.f32.xlu0 %v619
        %v621 = vpop.xlane.xlu0 %620
        %v622 = vmax.f32 %v612, 1.0
        %v623 = vmax.f32 %v615, 1.0
        %v624 = vmax.f32 %v618, 1.0
        %v625 = vmax.f32 %v621, 1.0
        %v626 = vrot.slane %v610, 4
        %v627 = vadd.f32 %v610, %v626
        %v628 = vrot.slane %v627, 2
        %v629 = vadd.f32 %v627, %v628
        %v630 = vrot.slane %v629, 1
        %v631 = vadd.f32 %v629, %v630
        %v632 = vrot.slane %v613, 4
        %v633 = vadd.f32 %v613, %v632
        %v634 = vrot.slane %v633, 2
        %v635 = vadd.f32 %v633, %v634
        %v636 = vrot.slane %v635, 1
        %v637 = vadd.f32 %v635, %v636
        %v638 = vrot.slane %v616, 4
        %v639 = vadd.f32 %v616, %v638
        %v640 = vrot.slane %v639, 2
        %v641 = vadd.f32 %v639, %v640
        %v642 = vrot.slane %v641, 1
        %v643 = vadd.f32 %v641, %v642
        %v644 = vrot.slane %v619, 4
        %v645 = vadd.f32 %v619, %v644
        %v646 = vrot.slane %v645, 2
        %v647 = vadd.f32 %v645, %v646
        %v648 = vrot.slane %v647, 1
        %v649 = vadd.f32 %v647, %v648
        %v650 = vmax.f32 %v631, 1.0
        %v651 = vmax.f32 %v637, 1.0
        %v652 = vmax.f32 %v643, 1.0
        %v653 = vmax.f32 %v649, 1.0
        %v654 = vrsqrt.pop %v622
        %v655 = vmul.f32 %v654, %v622
        %v656 = vmul.f32 %v655, %v654
        %v657 = vmul.f32 0.5, %v656
        %v658 = vsub.f32 1.5, %v657
        %v659 = vmul.f32 %v654, %v658
        %vm660 = vweird.f32 %v622
        %vm661 = vweird.f32 %v654
        %vm662 = vmor %vm660, %vm661
        %v663 = vsel %vm662, %v654, %v659
        %v664 = vrsqrt.pop %v623
        %v665 = vmul.f32 %v664, %v623
        %v666 = vmul.f32 %v665, %v664
        %v667 = vmul.f32 0.5, %v666
        %v668 = vsub.f32 1.5, %v667
        %v669 = vmul.f32 %v664, %v668
        %vm670 = vweird.f32 %v623
        %vm671 = vweird.f32 %v664
        %vm672 = vmor %vm670, %vm671
        %v673 = vsel %vm672, %v664, %v669
        %v674 = vrsqrt.pop %v624
        %v675 = vmul.f32 %v674, %v624
        %v676 = vmul.f32 %v675, %v674
        %v677 = vmul.f32 0.5, %v676
        %v678 = vsub.f32 1.5, %v677
        %v679 = vmul.f32 %v674, %v678
        %vm680 = vweird.f32 %v624
        %vm681 = vweird.f32 %v674
        %vm682 = vmor %vm680, %vm681
        %v683 = vsel %vm682, %v674, %v679
        %v684 = vrsqrt.pop %v625
        %v685 = vmul.f32 %v684, %v625
        %v686 = vmul.f32 %v685, %v684
        %v687 = vmul.f32 0.5, %v686
        %v688 = vsub.f32 1.5, %v687
        %v689 = vmul.f32 %v684, %v688
        %vm690 = vweird.f32 %v625
        %vm691 = vweird.f32 %v684
        %vm692 = vmor %vm690, %vm691
        %v693 = vsel %vm692, %v684, %v689
        %v694 = vmul.f32 %v605, %v663
        %v695 = vmul.f32 %v606, %v673
        %v696 = vmul.f32 %v607, %v683
        %v697 = vmul.f32 %v608, %v693
        %v698 = vrsqrt.pop %v650
        %v699 = vmul.f32 %v698, %v650
        %v700 = vmul.f32 %v699, %v698
        %v701 = vmul.f32 0.5, %v700
        %v702 = vsub.f32 1.5, %v701
        %v703 = vmul.f32 %v698, %v702
        %vm704 = vweird.f32 %v650
        %vm705 = vweird.f32 %v698
        %vm706 = vmor %vm704, %vm705
        %v707 = vsel %vm706, %v698, %v703
        %v708 = vrsqrt.pop %v651
        %v709 = vmul.f32 %v708, %v651
        %v710 = vmul.f32 %v709, %v708
        %v711 = vmul.f32 0.5, %v710
        %v712 = vsub.f32 1.5, %v711
        %v713 = vmul.f32 %v708, %v712
        %vm714 = vweird.f32 %v651
        %vm715 = vweird.f32 %v708
        %vm716 = vmor %vm714, %vm715
        %v717 = vsel %vm716, %v708, %v713
        %v718 = vrsqrt.pop %v652
        %v719 = vmul.f32 %v718, %v652
        %v720 = vmul.f32 %v719, %v718
        %v721 = vmul.f32 0.5, %v720
        %v722 = vsub.f32 1.5, %v721
        %v723 = vmul.f32 %v718, %v722
        %vm724 = vweird.f32 %v652
        %vm725 = vweird.f32 %v718
        %vm726 = vmor %vm724, %vm725
        %v727 = vsel %vm726, %v718, %v723
        %v728 = vrsqrt.pop %v653
        %v729 = vmul.f32 %v728, %v653
        %v730 = vmul.f32 %v729, %v728
        %v731 = vmul.f32 0.5, %v730
        %v732 = vsub.f32 1.5, %v731
        %v733 = vmul.f32 %v728, %v732
        %vm734 = vweird.f32 %v653
        %vm735 = vweird.f32 %v728
        %vm736 = vmor %vm734, %vm735
        %v737 = vsel %vm736, %v728, %v733
        %v738 = vmul.f32 %v694, %v707
        %v739 = vmul.f32 %v695, %v717
        %v740 = vmul.f32 %v696, %v727
        %v741 = vmul.f32 %v697, %v737
        %v742 = vld [vmem:[%s485] sm:$0xf]
        %v743 = vld [vmem:[%s485 + $0x4] sm:$0xf]
        %v744 = vld [vmem:[%s485 + $0x8] sm:$0xf]
        %v745 = vld [vmem:[%s485 + $0xc] sm:$0xf]
        %v746 = vunpack.c.l.bf16 %v742
        %v747 = vunpack.c.l.bf16 %v743
        %v748 = vunpack.c.l.bf16 %v744
        %v749 = vunpack.c.l.bf16 %v745
        %v750 = vsel %vm609, %v746, 0.0
        %751 = vadd.xlane.f32.xlu0 %v750
        %v752 = vpop.xlane.xlu0 %751
        %v753 = vsel %vm609, %v747, 0.0
        %754 = vadd.xlane.f32.xlu0 %v753
        %v755 = vpop.xlane.xlu0 %754
        %v756 = vsel %vm609, %v748, 0.0
        %757 = vadd.xlane.f32.xlu0 %v756
        %v758 = vpop.xlane.xlu0 %757
        %v759 = vsel %vm609, %v749, 0.0
        %760 = vadd.xlane.f32.xlu0 %v759
        %v761 = vpop.xlane.xlu0 %760
        %v762 = vmax.f32 %v752, 1.0
        %v763 = vmax.f32 %v755, 1.0
        %v764 = vmax.f32 %v758, 1.0
        %v765 = vmax.f32 %v761, 1.0
        %v766 = vrot.slane %v750, 4
        %v767 = vadd.f32 %v750, %v766
        %v768 = vrot.slane %v767, 2
        %v769 = vadd.f32 %v767, %v768
        %v770 = vrot.slane %v769, 1
        %v771 = vadd.f32 %v769, %v770
        %v772 = vrot.slane %v753, 4
        %v773 = vadd.f32 %v753, %v772
        %v774 = vrot.slane %v773, 2
        %v775 = vadd.f32 %v773, %v774
        %v776 = vrot.slane %v775, 1
        %v777 = vadd.f32 %v775, %v776
        %v778 = vrot.slane %v756, 4
        %v779 = vadd.f32 %v756, %v778
        %v780 = vrot.slane %v779, 2
        %v781 = vadd.f32 %v779, %v780
        %v782 = vrot.slane %v781, 1
        %v783 = vadd.f32 %v781, %v782
        %v784 = vrot.slane %v759, 4
        %v785 = vadd.f32 %v759, %v784
        %v786 = vrot.slane %v785, 2
        %v787 = vadd.f32 %v785, %v786
        %v788 = vrot.slane %v787, 1
        %v789 = vadd.f32 %v787, %v788
        %v790 = vmax.f32 %v771, 1.0
        %v791 = vmax.f32 %v777, 1.0
        %v792 = vmax.f32 %v783, 1.0
        %v793 = vmax.f32 %v789, 1.0
        %v794 = vrsqrt.pop %v762
        %v795 = vmul.f32 %v794, %v762
        %v796 = vmul.f32 %v795, %v794
        %v797 = vmul.f32 0.5, %v796
        %v798 = vsub.f32 1.5, %v797
        %v799 = vmul.f32 %v794, %v798
        %vm800 = vweird.f32 %v762
        %vm801 = vweird.f32 %v794
        %vm802 = vmor %vm800, %vm801
        %v803 = vsel %vm802, %v794, %v799
        %v804 = vrsqrt.pop %v763
        %v805 = vmul.f32 %v804, %v763
        %v806 = vmul.f32 %v805, %v804
        %v807 = vmul.f32 0.5, %v806
        %v808 = vsub.f32 1.5, %v807
        %v809 = vmul.f32 %v804, %v808
        %vm810 = vweird.f32 %v763
        %vm811 = vweird.f32 %v804
        %vm812 = vmor %vm810, %vm811
        %v813 = vsel %vm812, %v804, %v809
        %v814 = vrsqrt.pop %v764
        %v815 = vmul.f32 %v814, %v764
        %v816 = vmul.f32 %v815, %v814
        %v817 = vmul.f32 0.5, %v816
        %v818 = vsub.f32 1.5, %v817
        %v819 = vmul.f32 %v814, %v818
        %vm820 = vweird.f32 %v764
        %vm821 = vweird.f32 %v814
        %vm822 = vmor %vm820, %vm821
        %v823 = vsel %vm822, %v814, %v819
        %v824 = vrsqrt.pop %v765
        %v825 = vmul.f32 %v824, %v765
        %v826 = vmul.f32 %v825, %v824
        %v827 = vmul.f32 0.5, %v826
        %v828 = vsub.f32 1.5, %v827
        %v829 = vmul.f32 %v824, %v828
        %vm830 = vweird.f32 %v765
        %vm831 = vweird.f32 %v824
        %vm832 = vmor %vm830, %vm831
        %v833 = vsel %vm832, %v824, %v829
        %v834 = vmul.f32 %v746, %v803
        %v835 = vmul.f32 %v747, %v813
        %v836 = vmul.f32 %v748, %v823
        %v837 = vmul.f32 %v749, %v833
        %v838 = vrsqrt.pop %v790
        %v839 = vmul.f32 %v838, %v790
        %v840 = vmul.f32 %v839, %v838
        %v841 = vmul.f32 0.5, %v840
        %v842 = vsub.f32 1.5, %v841
        %v843 = vmul.f32 %v838, %v842
        %vm844 = vweird.f32 %v790
        %vm845 = vweird.f32 %v838
        %vm846 = vmor %vm844, %vm845
        %v847 = vsel %vm846, %v838, %v843
        %v848 = vrsqrt.pop %v791
        %v849 = vmul.f32 %v848, %v791
        %v850 = vmul.f32 %v849, %v848
        %v851 = vmul.f32 0.5, %v850
        %v852 = vsub.f32 1.5, %v851
        %v853 = vmul.f32 %v848, %v852
        %vm854 = vweird.f32 %v791
        %vm855 = vweird.f32 %v848
        %vm856 = vmor %vm854, %vm855
        %v857 = vsel %vm856, %v848, %v853
        %v858 = vrsqrt.pop %v792
        %v859 = vmul.f32 %v858, %v792
        %v860 = vmul.f32 %v859, %v858
        %v861 = vmul.f32 0.5, %v860
        %v862 = vsub.f32 1.5, %v861
        %v863 = vmul.f32 %v858, %v862
        %vm864 = vweird.f32 %v792
        %vm865 = vweird.f32 %v858
        %vm866 = vmor %vm864, %vm865
        %v867 = vsel %vm866, %v858, %v863
        %v868 = vrsqrt.pop %v793
        %v869 = vmul.f32 %v868, %v793
        %v870 = vmul.f32 %v869, %v868
        %v871 = vmul.f32 0.5, %v870
        %v872 = vsub.f32 1.5, %v871
        %v873 = vmul.f32 %v868, %v872
        %vm874 = vweird.f32 %v793
        %vm875 = vweird.f32 %v868
        %vm876 = vmor %vm874, %vm875
        %v877 = vsel %vm876, %v868, %v873
        %v878 = vmul.f32 %v834, %v847
        %v879 = vmul.f32 %v835, %v857
        %v880 = vmul.f32 %v836, %v867
        %v881 = vmul.f32 %v837, %v877
        %v882 = vld [vmem:[%s495] sm:$0xf]
        %v883 = vld [vmem:[%s495 + $0x4] sm:$0xf]
        %v884 = vld [vmem:[%s495 + $0x8] sm:$0xf]
        %v885 = vld [vmem:[%s495 + $0xc] sm:$0xf]
        %v886 = vunpack.c.l.bf16 %v882
        %v887 = vunpack.c.l.bf16 %v883
        %v888 = vunpack.c.l.bf16 %v884
        %v889 = vunpack.c.l.bf16 %v885
        %v890 = vsel %vm609, %v886, 0.0
        %891 = vadd.xlane.f32.xlu0 %v890
        %v892 = vpop.xlane.xlu0 %891
        %v893 = vsel %vm609, %v887, 0.0
        %894 = vadd.xlane.f32.xlu0 %v893
        %v895 = vpop.xlane.xlu0 %894
        %v896 = vsel %vm609, %v888, 0.0
        %897 = vadd.xlane.f32.xlu0 %v896
        %v898 = vpop.xlane.xlu0 %897
        %v899 = vsel %vm609, %v889, 0.0
        %900 = vadd.xlane.f32.xlu0 %v899
        %v901 = vpop.xlane.xlu0 %900
        %v902 = vmax.f32 %v892, 1.0
        %v903 = vmax.f32 %v895, 1.0
        %v904 = vmax.f32 %v898, 1.0
        %v905 = vmax.f32 %v901, 1.0
        %v906 = vrot.slane %v890, 4
        %v907 = vadd.f32 %v890, %v906
        %v908 = vrot.slane %v907, 2
        %v909 = vadd.f32 %v907, %v908
        %v910 = vrot.slane %v909, 1
        %v911 = vadd.f32 %v909, %v910
        %v912 = vrot.slane %v893, 4
        %v913 = vadd.f32 %v893, %v912
        %v914 = vrot.slane %v913, 2
        %v915 = vadd.f32 %v913, %v914
        %v916 = vrot.slane %v915, 1
        %v917 = vadd.f32 %v915, %v916
        %v918 = vrot.slane %v896, 4
        %v919 = vadd.f32 %v896, %v918
        %v920 = vrot.slane %v919, 2
        %v921 = vadd.f32 %v919, %v920
        %v922 = vrot.slane %v921, 1
        %v923 = vadd.f32 %v921, %v922
        %v924 = vrot.slane %v899, 4
        %v925 = vadd.f32 %v899, %v924
        %v926 = vrot.slane %v925, 2
        %v927 = vadd.f32 %v925, %v926
        %v928 = vrot.slane %v927, 1
        %v929 = vadd.f32 %v927, %v928
        %v930 = vmax.f32 %v911, 1.0
        %v931 = vmax.f32 %v917, 1.0
        %v932 = vmax.f32 %v923, 1.0
        %v933 = vmax.f32 %v929, 1.0
        %v934 = vrsqrt.pop %v902
        %v935 = vmul.f32 %v934, %v902
        %v936 = vmul.f32 %v935, %v934
        %v937 = vmul.f32 0.5, %v936
        %v938 = vsub.f32 1.5, %v937
        %v939 = vmul.f32 %v934, %v938
        %vm940 = vweird.f32 %v902
        %vm941 = vweird.f32 %v934
        %vm942 = vmor %vm940, %vm941
        %v943 = vsel %vm942, %v934, %v939
        %v944 = vrsqrt.pop %v903
        %v945 = vmul.f32 %v944, %v903
        %v946 = vmul.f32 %v945, %v944
        %v947 = vmul.f32 0.5, %v946
        %v948 = vsub.f32 1.5, %v947
        %v949 = vmul.f32 %v944, %v948
        %vm950 = vweird.f32 %v903
        %vm951 = vweird.f32 %v944
        %vm952 = vmor %vm950, %vm951
        %v953 = vsel %vm952, %v944, %v949
        %v954 = vrsqrt.pop %v904
        %v955 = vmul.f32 %v954, %v904
        %v956 = vmul.f32 %v955, %v954
        %v957 = vmul.f32 0.5, %v956
        %v958 = vsub.f32 1.5, %v957
        %v959 = vmul.f32 %v954, %v958
        %vm960 = vweird.f32 %v904
        %vm961 = vweird.f32 %v954
        %vm962 = vmor %vm960, %vm961
        %v963 = vsel %vm962, %v954, %v959
        %v964 = vrsqrt.pop %v905
        %v965 = vmul.f32 %v964, %v905
        %v966 = vmul.f32 %v965, %v964
        %v967 = vmul.f32 0.5, %v966
        %v968 = vsub.f32 1.5, %v967
        %v969 = vmul.f32 %v964, %v968
        %vm970 = vweird.f32 %v905
        %vm971 = vweird.f32 %v964
        %vm972 = vmor %vm970, %vm971
        %v973 = vsel %vm972, %v964, %v969
        %v974 = vmul.f32 %v886, %v943
        %v975 = vmul.f32 %v887, %v953
        %v976 = vmul.f32 %v888, %v963
        %v977 = vmul.f32 %v889, %v973
        %v978 = vrsqrt.pop %v930
        %v979 = vmul.f32 %v978, %v930
        %v980 = vmul.f32 %v979, %v978
        %v981 = vmul.f32 0.5, %v980
        %v982 = vsub.f32 1.5, %v981
        %v983 = vmul.f32 %v978, %v982
        %vm984 = vweird.f32 %v930
        %vm985 = vweird.f32 %v978
        %vm986 = vmor %vm984, %vm985
        %v987 = vsel %vm986, %v978, %v983
        %v988 = vrsqrt.pop %v931
        %v989 = vmul.f32 %v988, %v931
        %v990 = vmul.f32 %v989, %v988
        %v991 = vmul.f32 0.5, %v990
        %v992 = vsub.f32 1.5, %v991
        %v993 = vmul.f32 %v988, %v992
        %vm994 = vweird.f32 %v931
        %vm995 = vweird.f32 %v988
        %vm996 = vmor %vm994, %vm995
        %v997 = vsel %vm996, %v988, %v993
        %v998 = vrsqrt.pop %v932
        %v999 = vmul.f32 %v998, %v932
        %v1000 = vmul.f32 %v999, %v998
        %v1001 = vmul.f32 0.5, %v1000
        %v1002 = vsub.f32 1.5, %v1001
        %v1003 = vmul.f32 %v998, %v1002
        %vm1004 = vweird.f32 %v932
        %vm1005 = vweird.f32 %v998
        %vm1006 = vmor %vm1004, %vm1005
        %v1007 = vsel %vm1006, %v998, %v1003
        %v1008 = vrsqrt.pop %v933
        %v1009 = vmul.f32 %v1008, %v933
        %v1010 = vmul.f32 %v1009, %v1008
        %v1011 = vmul.f32 0.5, %v1010
        %v1012 = vsub.f32 1.5, %v1011
        %v1013 = vmul.f32 %v1008, %v1012
        %vm1014 = vweird.f32 %v933
        %vm1015 = vweird.f32 %v1008
        %vm1016 = vmor %vm1014, %vm1015
        %v1017 = vsel %vm1016, %v1008, %v1013
        %v1018 = vmul.f32 %v974, %v987
        %v1019 = vmul.f32 %v975, %v997
        %v1020 = vmul.f32 %v976, %v1007
        %v1021 = vmul.f32 %v977, %v1017
        %v1022 = vld [vmem:[%s505] sm:$0xf]
        %v1023 = vld [vmem:[%s505 + $0x4] sm:$0xf]
        %v1024 = vld [vmem:[%s505 + $0x8] sm:$0xf]
        %v1025 = vld [vmem:[%s505 + $0xc] sm:$0xf]
        %v1026 = vld [vmem:[%s515] sm:$0xf]
        %v1027 = vld [vmem:[%s515 + $0x4] sm:$0xf]
        %v1028 = vld [vmem:[%s515 + $0x8] sm:$0xf]
        %v1029 = vld [vmem:[%s515 + $0xc] sm:$0xf]
        %v1030 = vld [vmem:[%s7] sm:$0x1]
        %v1031 = vld [vmem:[%s7 + $0x1] sm:$0x1]
        %v1032 = vld [vmem:[%s7 + $0x2] sm:$0x1]
        %v1033 = vld [vmem:[#allocation10] sm:$0xf]
        %v1034 = vld [vmem:[#allocation10 + $0x4] sm:$0xf]
        %v1035 = vld [vmem:[#allocation10 + $0x8] sm:$0xf]
        %v1036 = vld [vmem:[#allocation10 + $0xc] sm:$0xf]
        %v1041 = vunpack.c.l.b16 %v1022
        %v1042 = vunpack.c.l.b16 %v1023
        %v1043 = vunpack.c.l.b16 %v1024
        %v1044 = vunpack.c.l.b16 %v1025
        %v1045 = vpack.c.b16 %v1042, %v1041
        %v1046 = vpack.c.b16 %v1044, %v1043
        %v1051 = vunpack.c.l.b16 %v1033
        %v1052 = vunpack.c.l.b16 %v1034
        %v1053 = vunpack.c.l.b16 %v1035
        %v1054 = vunpack.c.l.b16 %v1036
        %v1055 = vpack.c.b16 %v1052, %v1051
        %v1056 = vpack.c.b16 %v1054, %v1053
        %vm1059 = vcmask 261120
        %v1061 = vsel %vm1059, %v1045, 0
        %v1064 = vsel %vm1059, %v1046, 0
        %1066 = vmatpush.bf16.msra.mxu0 0
        %1067 = vmatpush.bf16.msra.mxu0 0
        %1068 = vmatpush.bf16.msra.mxu0 0
        %1069 = vmatpush.bf16.msra.mxu0 0
        %1070 = vmatpush.bf16.msra.mxu0 0
        %1071 = vmatpush.bf16.msra.mxu0 0
        %1072 = vmatpush.bf16.msra.mxu0 %v1056
        %1073 = vmatpush.bf16.msra.mxu0 %v1055
        %1074 = vmatmul.bf16.gmra.mxu0 %v1061
        %v1075 = vpop.f32.mrf.mxu0
        %v1076 = vadd.f32 0.0, %v1075
        %v1077 = vpop.f32.mrf.mxu0
        %v1078 = vadd.f32 0.0, %v1077
        %1079 = vmatmul.bf16.gmra.mxu0 %v1064
        %v1080 = vpop.f32.mrf.mxu0
        %v1081 = vadd.f32 0.0, %v1080
        %v1082 = vpop.f32.mrf.mxu0
        %v1083 = vadd.f32 0.0, %v1082
        %1084 = vdwg.mxu0
        %v1085 = vpack.c.bf16 %v1076, %v1076
        %v1086 = vpack.c.bf16 %v1078, %v1078
        %v1087 = vpack.c.bf16 %v1081, %v1081
        %v1088 = vpack.c.bf16 %v1083, %v1083
        %v1089 = vpack.c.bf16 %v738, %v738
        %v1090 = vpack.c.bf16 %v739, %v739
        %v1091 = vpack.c.bf16 %v740, %v740
        %v1092 = vpack.c.bf16 %v741, %v741
        %s1093 = scalar_lea.vmem [#allocation10], 16
        %v1094 = vld [vmem:[%s1093] sm:$0xf]
        %v1095 = vld [vmem:[%s1093 + $0x4] sm:$0xf]
        %v1096 = vld [vmem:[%s1093 + $0x8] sm:$0xf]
        %v1097 = vld [vmem:[%s1093 + $0xc] sm:$0xf]
        %v1102 = vunpack.c.l.b16 %v1026
        %v1103 = vunpack.c.l.b16 %v1027
        %v1104 = vunpack.c.l.b16 %v1028
        %v1105 = vunpack.c.l.b16 %v1029
        %v1106 = vpack.c.b16 %v1103, %v1102
        %v1107 = vpack.c.b16 %v1105, %v1104
        %v1112 = vunpack.c.l.b16 %v1094
        %v1113 = vunpack.c.l.b16 %v1095
        %v1114 = vunpack.c.l.b16 %v1096
        %v1115 = vunpack.c.l.b16 %v1097
        %v1116 = vpack.c.b16 %v1113, %v1112
        %v1117 = vpack.c.b16 %v1115, %v1114
        %v1121 = vsel %vm1059, %v1106, 0
        %v1124 = vsel %vm1059, %v1107, 0
        %1126 = vmatpush.bf16.msra.mxu0 0
        %1127 = vmatpush.bf16.msra.mxu0 0
        %1128 = vmatpush.bf16.msra.mxu0 0
        %1129 = vmatpush.bf16.msra.mxu0 0
        %1130 = vmatpush.bf16.msra.mxu0 0
        %1131 = vmatpush.bf16.msra.mxu0 0
        %1132 = vmatpush.bf16.msra.mxu0 %v1117
        %1133 = vmatpush.bf16.msra.mxu0 %v1116
        %1134 = vmatmul.bf16.gmra.mxu0 %v1121
        %v1135 = vpop.f32.mrf.mxu0
        %v1136 = vadd.f32 0.0, %v1135
        %v1137 = vpop.f32.mrf.mxu0
        %v1138 = vadd.f32 0.0, %v1137
        %1139 = vmatmul.bf16.gmra.mxu0 %v1124
        %v1140 = vpop.f32.mrf.mxu0
        %v1141 = vadd.f32 0.0, %v1140
        %v1142 = vpop.f32.mrf.mxu0
        %v1143 = vadd.f32 0.0, %v1142
        %1144 = vdwg.mxu0
        %v1145 = vpack.c.bf16 %v1136, %v1136
        %v1146 = vpack.c.bf16 %v1138, %v1138
        %v1147 = vpack.c.bf16 %v1141, %v1141
        %v1148 = vpack.c.bf16 %v1143, %v1143
        %v1149 = vpack.c.bf16 %v1018, %v1018
        %v1150 = vpack.c.bf16 %v1019, %v1019
        %v1151 = vpack.c.bf16 %v1020, %v1020
        %v1152 = vpack.c.bf16 %v1021, %v1021
        %v1154 = vsel %vm609, %v1149, 0
        %vm1156 = vcmask 1043456
        %v1158 = vsel %vm1156, %v1145, 0
        %1160 = vmatpush.bf16.msra.mxu0 0
        %1161 = vmatpush.bf16.msra.mxu0 0
        %1162 = vmatpush.bf16.msra.mxu0 0
        %1163 = vmatpush.bf16.msra.mxu0 0
        %1164 = vmatpush.bf16.msra.mxu0 0
        %1165 = vmatpush.bf16.msra.mxu0 0
        %1166 = vmatpush.bf16.msra.mxu0 0
        %1167 = vmatpush.bf16.msra.mxu0 %v1158
        %1168 = vmatmul.bf16.gmra.mxu0 %v1154
        %v1169 = vpop.f32.mrf.mxu0
        %v1170 = vadd.f32 0.0, %v1169
        %v1171 = vpop.f32.mrf.mxu0
        %1172 = vdwg.mxu0
        %v1174 = vsel %vm609, %v1150, 0
        %v1177 = vsel %vm1156, %v1146, 0
        %1179 = vmatpush.bf16.msra.mxu0 0
        %1180 = vmatpush.bf16.msra.mxu0 0
        %1181 = vmatpush.bf16.msra.mxu0 0
        %1182 = vmatpush.bf16.msra.mxu0 0
        %1183 = vmatpush.bf16.msra.mxu0 0
        %1184 = vmatpush.bf16.msra.mxu0 0
        %1185 = vmatpush.bf16.msra.mxu0 0
        %1186 = vmatpush.bf16.msra.mxu0 %v1177
        %1187 = vmatmul.bf16.gmra.mxu0 %v1174
        %v1188 = vpop.f32.mrf.mxu0
        %v1189 = vadd.f32 0.0, %v1188
        %v1190 = vpop.f32.mrf.mxu0
        %1191 = vdwg.mxu0
        %v1193 = vsel %vm609, %v1151, 0
        %v1196 = vsel %vm1156, %v1147, 0
        %1198 = vmatpush.bf16.msra.mxu0 0
        %1199 = vmatpush.bf16.msra.mxu0 0
        %1200 = vmatpush.bf16.msra.mxu0 0
        %1201 = vmatpush.bf16.msra.mxu0 0
        %1202 = vmatpush.bf16.msra.mxu0 0
        %1203 = vmatpush.bf16.msra.mxu0 0
        %1204 = vmatpush.bf16.msra.mxu0 0
        %1205 = vmatpush.bf16.msra.mxu0 %v1196
        %1206 = vmatmul.bf16.gmra.mxu0 %v1193
        %v1207 = vpop.f32.mrf.mxu0
        %v1208 = vadd.f32 0.0, %v1207
        %v1209 = vpop.f32.mrf.mxu0
        %1210 = vdwg.mxu0
        %v1212 = vsel %vm609, %v1152, 0
        %v1215 = vsel %vm1156, %v1148, 0
        %1217 = vmatpush.bf16.msra.mxu0 0
        %1218 = vmatpush.bf16.msra.mxu0 0
        %1219 = vmatpush.bf16.msra.mxu0 0
        %1220 = vmatpush.bf16.msra.mxu0 0
        %1221 = vmatpush.bf16.msra.mxu0 0
        %1222 = vmatpush.bf16.msra.mxu0 0
        %1223 = vmatpush.bf16.msra.mxu0 0
        %1224 = vmatpush.bf16.msra.mxu0 %v1215
        %1225 = vmatmul.bf16.gmra.mxu0 %v1212
        %v1226 = vpop.f32.mrf.mxu0
        %v1227 = vadd.f32 0.0, %v1226
        %v1228 = vpop.f32.mrf.mxu0
        %1229 = vdwg.mxu0
        %v1231 = vsel %vm609, %v1089, 0
        %v1234 = vsel %vm1156, %v1085, 0
        %1236 = vmatpush.bf16.msra.mxu0 0
        %1237 = vmatpush.bf16.msra.mxu0 0
        %1238 = vmatpush.bf16.msra.mxu0 0
        %1239 = vmatpush.bf16.msra.mxu0 0
        %1240 = vmatpush.bf16.msra.mxu0 0
        %1241 = vmatpush.bf16.msra.mxu0 0
        %1242 = vmatpush.bf16.msra.mxu0 0
        %1243 = vmatpush.bf16.msra.mxu0 %v1234
        %1244 = vmatmul.bf16.gmra.mxu0 %v1231
        %v1245 = vpop.f32.mrf.mxu0
        %v1246 = vadd.f32 %v1170, %v1245
        %v1247 = vpop.f32.mrf.mxu0
        %1248 = vdwg.mxu0
        %v1250 = vsel %vm609, %v1090, 0
        %v1253 = vsel %vm1156, %v1086, 0
        %1255 = vmatpush.bf16.msra.mxu0 0
        %1256 = vmatpush.bf16.msra.mxu0 0
        %1257 = vmatpush.bf16.msra.mxu0 0
        %1258 = vmatpush.bf16.msra.mxu0 0
        %1259 = vmatpush.bf16.msra.mxu0 0
        %1260 = vmatpush.bf16.msra.mxu0 0
        %1261 = vmatpush.bf16.msra.mxu0 0
        %1262 = vmatpush.bf16.msra.mxu0 %v1253
        %1263 = vmatmul.bf16.gmra.mxu0 %v1250
        %v1264 = vpop.f32.mrf.mxu0
        %v1265 = vadd.f32 %v1189, %v1264
        %v1266 = vpop.f32.mrf.mxu0
        %1267 = vdwg.mxu0
        %v1269 = vsel %vm609, %v1091, 0
        %v1272 = vsel %vm1156, %v1087, 0
        %1274 = vmatpush.bf16.msra.mxu0 0
        %1275 = vmatpush.bf16.msra.mxu0 0
        %1276 = vmatpush.bf16.msra.mxu0 0
        %1277 = vmatpush.bf16.msra.mxu0 0
        %1278 = vmatpush.bf16.msra.mxu0 0
        %1279 = vmatpush.bf16.msra.mxu0 0
        %1280 = vmatpush.bf16.msra.mxu0 0
        %1281 = vmatpush.bf16.msra.mxu0 %v1272
        %1282 = vmatmul.bf16.gmra.mxu0 %v1269
        %v1283 = vpop.f32.mrf.mxu0
        %v1284 = vadd.f32 %v1208, %v1283
        %v1285 = vpop.f32.mrf.mxu0
        %1286 = vdwg.mxu0
        %v1288 = vsel %vm609, %v1092, 0
        %v1291 = vsel %vm1156, %v1088, 0
        %1293 = vmatpush.bf16.msra.mxu0 0
        %1294 = vmatpush.bf16.msra.mxu0 0
        %1295 = vmatpush.bf16.msra.mxu0 0
        %1296 = vmatpush.bf16.msra.mxu0 0
        %1297 = vmatpush.bf16.msra.mxu0 0
        %1298 = vmatpush.bf16.msra.mxu0 0
        %1299 = vmatpush.bf16.msra.mxu0 0
        %1300 = vmatpush.bf16.msra.mxu0 %v1291
        %1301 = vmatmul.bf16.gmra.mxu0 %v1288
        %v1302 = vpop.f32.mrf.mxu0
        %v1303 = vadd.f32 %v1227, %v1302
        %v1304 = vpop.f32.mrf.mxu0
        %1305 = vdwg.mxu0
        %v1306 = vperm.slane %v1030, 0
        %v1307 = vadd.f32 %v1246, %v1306
        %v1308 = vadd.f32 %v1265, %v1306
        %v1309 = vadd.f32 %v1284, %v1306
        %v1310 = vadd.f32 %v1303, %v1306
        %v1311 = vmax.f32 %v1307, 0.0
        %v1312 = vmax.f32 %v1308, 0.0
        %v1313 = vmax.f32 %v1309, 0.0
        %v1314 = vmax.f32 %v1310, 0.0
        %s1315 = scalar_lea.vmem [#allocation10], 32
        %v1316 = vld [vmem:[%s1315] sm:$0xf]
        %v1317 = vld [vmem:[%s1315 + $0x4] sm:$0xf]
        %v1318 = vld [vmem:[%s1315 + $0x8] sm:$0xf]
        %v1319 = vld [vmem:[%s1315 + $0xc] sm:$0xf]
        %v1324 = vunpack.c.l.b16 %v1316
        %v1325 = vunpack.c.l.b16 %v1317
        %v1326 = vunpack.c.l.b16 %v1318
        %v1327 = vunpack.c.l.b16 %v1319
        %v1328 = vpack.c.b16 %v1325, %v1324
        %v1329 = vpack.c.b16 %v1327, %v1326
        %1332 = vmatpush.bf16.msra.mxu0 0
        %1333 = vmatpush.bf16.msra.mxu0 0
        %1334 = vmatpush.bf16.msra.mxu0 0
        %1335 = vmatpush.bf16.msra.mxu0 0
        %1336 = vmatpush.bf16.msra.mxu0 0
        %1337 = vmatpush.bf16.msra.mxu0 0
        %1338 = vmatpush.bf16.msra.mxu0 %v1329
        %1339 = vmatpush.bf16.msra.mxu0 %v1328
        %1340 = vmatmul.bf16.gmra.mxu0 %v1061
        %v1341 = vpop.f32.mrf.mxu0
        %v1342 = vadd.f32 0.0, %v1341
        %v1343 = vpop.f32.mrf.mxu0
        %v1344 = vadd.f32 0.0, %v1343
        %1345 = vmatmul.bf16.gmra.mxu0 %v1064
        %v1346 = vpop.f32.mrf.mxu0
        %v1347 = vadd.f32 0.0, %v1346
        %v1348 = vpop.f32.mrf.mxu0
        %v1349 = vadd.f32 0.0, %v1348
        %1350 = vdwg.mxu0
        %v1351 = vpack.c.bf16 %v1342, %v1342
        %v1352 = vpack.c.bf16 %v1344, %v1344
        %v1353 = vpack.c.bf16 %v1347, %v1347
        %v1354 = vpack.c.bf16 %v1349, %v1349
        %v1355 = vpack.c.bf16 %v878, %v878
        %v1356 = vpack.c.bf16 %v879, %v879
        %v1357 = vpack.c.bf16 %v880, %v880
        %v1358 = vpack.c.bf16 %v881, %v881
        %v1359 = vperm.slane %v1031, 0
        %v1361 = vsel %vm609, %v1355, 0
        %v1364 = vsel %vm1156, %v1351, 0
        %1366 = vmatpush.bf16.msra.mxu0 0
        %1367 = vmatpush.bf16.msra.mxu0 0
        %1368 = vmatpush.bf16.msra.mxu0 0
        %1369 = vmatpush.bf16.msra.mxu0 0
        %1370 = vmatpush.bf16.msra.mxu0 0
        %1371 = vmatpush.bf16.msra.mxu0 0
        %1372 = vmatpush.bf16.msra.mxu0 0
        %1373 = vmatpush.bf16.msra.mxu0 %v1364
        %1374 = vmatmul.bf16.gmra.mxu0 %v1361
        %v1375 = vpop.f32.mrf.mxu0
        %v1376 = vadd.f32 %v1359, %v1375
        %v1377 = vpop.f32.mrf.mxu0
        %1378 = vdwg.mxu0
        %v1380 = vsel %vm609, %v1356, 0
        %v1383 = vsel %vm1156, %v1352, 0
        %1385 = vmatpush.bf16.msra.mxu0 0
        %1386 = vmatpush.bf16.msra.mxu0 0
        %1387 = vmatpush.bf16.msra.mxu0 0
        %1388 = vmatpush.bf16.msra.mxu0 0
        %1389 = vmatpush.bf16.msra.mxu0 0
        %1390 = vmatpush.bf16.msra.mxu0 0
        %1391 = vmatpush.bf16.msra.mxu0 0
        %1392 = vmatpush.bf16.msra.mxu0 %v1383
        %1393 = vmatmul.bf16.gmra.mxu0 %v1380
        %v1394 = vpop.f32.mrf.mxu0
        %v1395 = vadd.f32 %v1359, %v1394
        %v1396 = vpop.f32.mrf.mxu0
        %1397 = vdwg.mxu0
        %v1399 = vsel %vm609, %v1357, 0
        %v1402 = vsel %vm1156, %v1353, 0
        %1404 = vmatpush.bf16.msra.mxu0 0
        %1405 = vmatpush.bf16.msra.mxu0 0
        %1406 = vmatpush.bf16.msra.mxu0 0
        %1407 = vmatpush.bf16.msra.mxu0 0
        %1408 = vmatpush.bf16.msra.mxu0 0
        %1409 = vmatpush.bf16.msra.mxu0 0
        %1410 = vmatpush.bf16.msra.mxu0 0
        %1411 = vmatpush.bf16.msra.mxu0 %v1402
        %1412 = vmatmul.bf16.gmra.mxu0 %v1399
        %v1413 = vpop.f32.mrf.mxu0
        %v1414 = vadd.f32 %v1359, %v1413
        %v1415 = vpop.f32.mrf.mxu0
        %1416 = vdwg.mxu0
        %v1418 = vsel %vm609, %v1358, 0
        %v1421 = vsel %vm1156, %v1354, 0
        %1423 = vmatpush.bf16.msra.mxu0 0
        %1424 = vmatpush.bf16.msra.mxu0 0
        %1425 = vmatpush.bf16.msra.mxu0 0
        %1426 = vmatpush.bf16.msra.mxu0 0
        %1427 = vmatpush.bf16.msra.mxu0 0
        %1428 = vmatpush.bf16.msra.mxu0 0
        %1429 = vmatpush.bf16.msra.mxu0 0
        %1430 = vmatpush.bf16.msra.mxu0 %v1421
        %1431 = vmatmul.bf16.gmra.mxu0 %v1418
        %v1432 = vpop.f32.mrf.mxu0
        %v1433 = vadd.f32 %v1359, %v1432
        %v1434 = vpop.f32.mrf.mxu0
        %1435 = vdwg.mxu0
        %v1436 = vmax.f32 %v1376, 0.0
        %v1437 = vmax.f32 %v1395, 0.0
        %v1438 = vmax.f32 %v1414, 0.0
        %v1439 = vmax.f32 %v1433, 0.0
        %v1440 = vsel %vm609, %v738, 0.0
        %v1441 = vrot.slane %v1440, 4
        %v1442 = vadd.f32 %v1440, %v1441
        %v1443 = vrot.slane %v1442, 2
        %v1444 = vadd.f32 %v1442, %v1443
        %v1445 = vrot.slane %v1444, 1
        %v1446 = vadd.f32 %v1444, %v1445
        %v1447 = vsel %vm609, %v739, 0.0
        %v1448 = vrot.slane %v1447, 4
        %v1449 = vadd.f32 %v1447, %v1448
        %v1450 = vrot.slane %v1449, 2
        %v1451 = vadd.f32 %v1449, %v1450
        %v1452 = vrot.slane %v1451, 1
        %v1453 = vadd.f32 %v1451, %v1452
        %v1454 = vsel %vm609, %v740, 0.0
        %v1455 = vrot.slane %v1454, 4
        %v1456 = vadd.f32 %v1454, %v1455
        %v1457 = vrot.slane %v1456, 2
        %v1458 = vadd.f32 %v1456, %v1457
        %v1459 = vrot.slane %v1458, 1
        %v1460 = vadd.f32 %v1458, %v1459
        %v1461 = vsel %vm609, %v741, 0.0
        %v1462 = vrot.slane %v1461, 4
        %v1463 = vadd.f32 %v1461, %v1462
        %v1464 = vrot.slane %v1463, 2
        %v1465 = vadd.f32 %v1463, %v1464
        %v1466 = vrot.slane %v1465, 1
        %v1467 = vadd.f32 %v1465, %v1466
        %v1468 = vrcp.pop 8.0
        %v1469 = vmul.f32 8.0, %v1468
        %v1470 = vsub.f32 1.0, %v1469
        %v1471 = vmul.f32 %v1468, %v1470
        %v1472 = vadd.f32 %v1468, %v1471
        %vm1473 = vweird.f32 %v1468
        %v1474 = vsel %vm1473, %v1468, %v1472
        %v1475 = vmul.f32 %v1446, %v1474
        %v1476 = vmul.f32 %v1453, %v1474
        %v1477 = vmul.f32 %v1460, %v1474
        %v1478 = vmul.f32 %v1467, %v1474
        %v1479 = vsel %vm609, %v1018, 0.0
        %v1480 = vrot.slane %v1479, 4
        %v1481 = vadd.f32 %v1479, %v1480
        %v1482 = vrot.slane %v1481, 2
        %v1483 = vadd.f32 %v1481, %v1482
        %v1484 = vrot.slane %v1483, 1
        %v1485 = vadd.f32 %v1483, %v1484
        %v1486 = vsel %vm609, %v1019, 0.0
        %v1487 = vrot.slane %v1486, 4
        %v1488 = vadd.f32 %v1486, %v1487
        %v1489 = vrot.slane %v1488, 2
        %v1490 = vadd.f32 %v1488, %v1489
        %v1491 = vrot.slane %v1490, 1
        %v1492 = vadd.f32 %v1490, %v1491
        %v1493 = vsel %vm609, %v1020, 0.0
        %v1494 = vrot.slane %v1493, 4
        %v1495 = vadd.f32 %v1493, %v1494
        %v1496 = vrot.slane %v1495, 2
        %v1497 = vadd.f32 %v1495, %v1496
        %v1498 = vrot.slane %v1497, 1
        %v1499 = vadd.f32 %v1497, %v1498
        %v1500 = vsel %vm609, %v1021, 0.0
        %v1501 = vrot.slane %v1500, 4
        %v1502 = vadd.f32 %v1500, %v1501
        %v1503 = vrot.slane %v1502, 2
        %v1504 = vadd.f32 %v1502, %v1503
        %v1505 = vrot.slane %v1504, 1
        %v1506 = vadd.f32 %v1504, %v1505
        %v1507 = vmul.f32 %v1485, %v1474
        %v1508 = vmul.f32 %v1492, %v1474
        %v1509 = vmul.f32 %v1499, %v1474
        %v1510 = vmul.f32 %v1506, %v1474
        %v1511 = vsel %vm609, %v878, 0.0
        %v1512 = vrot.slane %v1511, 4
        %v1513 = vadd.f32 %v1511, %v1512
        %v1514 = vrot.slane %v1513, 2
        %v1515 = vadd.f32 %v1513, %v1514
        %v1516 = vrot.slane %v1515, 1
        %v1517 = vadd.f32 %v1515, %v1516
        %v1518 = vsel %vm609, %v879, 0.0
        %v1519 = vrot.slane %v1518, 4
        %v1520 = vadd.f32 %v1518, %v1519
        %v1521 = vrot.slane %v1520, 2
        %v1522 = vadd.f32 %v1520, %v1521
        %v1523 = vrot.slane %v1522, 1
        %v1524 = vadd.f32 %v1522, %v1523
        %v1525 = vsel %vm609, %v880, 0.0
        %v1526 = vrot.slane %v1525, 4
        %v1527 = vadd.f32 %v1525, %v1526
        %v1528 = vrot.slane %v1527, 2
        %v1529 = vadd.f32 %v1527, %v1528
        %v1530 = vrot.slane %v1529, 1
        %v1531 = vadd.f32 %v1529, %v1530
        %v1532 = vsel %vm609, %v881, 0.0
        %v1533 = vrot.slane %v1532, 4
        %v1534 = vadd.f32 %v1532, %v1533
        %v1535 = vrot.slane %v1534, 2
        %v1536 = vadd.f32 %v1534, %v1535
        %v1537 = vrot.slane %v1536, 1
        %v1538 = vadd.f32 %v1536, %v1537
        %v1539 = vmul.f32 %v1517, %v1474
        %v1540 = vmul.f32 %v1524, %v1474
        %v1541 = vmul.f32 %v1531, %v1474
        %v1542 = vmul.f32 %v1538, %v1474
        %v1543 = vpack.c.bf16 %v1475, %v1475
        %v1544 = vpack.c.bf16 %v1476, %v1476
        %v1545 = vpack.c.bf16 %v1477, %v1477
        %v1546 = vpack.c.bf16 %v1478, %v1478
        %v1547 = vpack.c.bf16 %v1311, %v1311
        %v1548 = vpack.c.bf16 %v1312, %v1312
        %v1549 = vpack.c.bf16 %v1313, %v1313
        %v1550 = vpack.c.bf16 %v1314, %v1314
        %v1552 = vsel %vm609, %v1543, 0
        %v1555 = vsel %vm1156, %v1547, 0
        %1557 = vmatpush.bf16.msra.mxu0 0
        %1558 = vmatpush.bf16.msra.mxu0 0
        %1559 = vmatpush.bf16.msra.mxu0 0
        %1560 = vmatpush.bf16.msra.mxu0 0
        %1561 = vmatpush.bf16.msra.mxu0 0
        %1562 = vmatpush.bf16.msra.mxu0 0
        %1563 = vmatpush.bf16.msra.mxu0 0
        %1564 = vmatpush.bf16.msra.mxu0 %v1555
        %1565 = vmatmul.bf16.gmra.mxu0 %v1552
        %v1566 = vpop.f32.mrf.mxu0
        %v1567 = vadd.f32 0.0, %v1566
        %v1568 = vpop.f32.mrf.mxu0
        %1569 = vdwg.mxu0
        %v1571 = vsel %vm609, %v1544, 0
        %v1574 = vsel %vm1156, %v1548, 0
        %1576 = vmatpush.bf16.msra.mxu0 0
        %1577 = vmatpush.bf16.msra.mxu0 0
        %1578 = vmatpush.bf16.msra.mxu0 0
        %1579 = vmatpush.bf16.msra.mxu0 0
        %1580 = vmatpush.bf16.msra.mxu0 0
        %1581 = vmatpush.bf16.msra.mxu0 0
        %1582 = vmatpush.bf16.msra.mxu0 0
        %1583 = vmatpush.bf16.msra.mxu0 %v1574
        %1584 = vmatmul.bf16.gmra.mxu0 %v1571
        %v1585 = vpop.f32.mrf.mxu0
        %v1586 = vadd.f32 0.0, %v1585
        %v1587 = vpop.f32.mrf.mxu0
        %1588 = vdwg.mxu0
        %v1590 = vsel %vm609, %v1545, 0
        %v1593 = vsel %vm1156, %v1549, 0
        %1595 = vmatpush.bf16.msra.mxu0 0
        %1596 = vmatpush.bf16.msra.mxu0 0
        %1597 = vmatpush.bf16.msra.mxu0 0
        %1598 = vmatpush.bf16.msra.mxu0 0
        %1599 = vmatpush.bf16.msra.mxu0 0
        %1600 = vmatpush.bf16.msra.mxu0 0
        %1601 = vmatpush.bf16.msra.mxu0 0
        %1602 = vmatpush.bf16.msra.mxu0 %v1593
        %1603 = vmatmul.bf16.gmra.mxu0 %v1590
        %v1604 = vpop.f32.mrf.mxu0
        %v1605 = vadd.f32 0.0, %v1604
        %v1606 = vpop.f32.mrf.mxu0
        %1607 = vdwg.mxu0
        %v1609 = vsel %vm609, %v1546, 0
        %v1612 = vsel %vm1156, %v1550, 0
        %1614 = vmatpush.bf16.msra.mxu0 0
        %1615 = vmatpush.bf16.msra.mxu0 0
        %1616 = vmatpush.bf16.msra.mxu0 0
        %1617 = vmatpush.bf16.msra.mxu0 0
        %1618 = vmatpush.bf16.msra.mxu0 0
        %1619 = vmatpush.bf16.msra.mxu0 0
        %1620 = vmatpush.bf16.msra.mxu0 0
        %1621 = vmatpush.bf16.msra.mxu0 %v1612
        %1622 = vmatmul.bf16.gmra.mxu0 %v1609
        %v1623 = vpop.f32.mrf.mxu0
        %v1624 = vadd.f32 0.0, %v1623
        %v1625 = vpop.f32.mrf.mxu0
        %1626 = vdwg.mxu0
        %v1627 = vpack.c.bf16 %v1567, %v1567
        %v1628 = vpack.c.bf16 %v1586, %v1586
        %v1629 = vpack.c.bf16 %v1605, %v1605
        %v1630 = vpack.c.bf16 %v1624, %v1624
        %v1631 = vld [vmem:[#allocation11] sm:$0xf]
        %v1632 = vld [vmem:[#allocation11 + $0x4] sm:$0xf]
        %v1633 = vld [vmem:[#allocation11 + $0x8] sm:$0xf]
        %v1634 = vld [vmem:[#allocation11 + $0xc] sm:$0xf]
        %v1635 = vpack.c.bf16 %v1507, %v1507
        %v1636 = vpack.c.bf16 %v1508, %v1508
        %v1637 = vpack.c.bf16 %v1509, %v1509
        %v1638 = vpack.c.bf16 %v1510, %v1510
        %v1639 = vpack.c.bf16 %v1436, %v1436
        %v1640 = vpack.c.bf16 %v1437, %v1437
        %v1641 = vpack.c.bf16 %v1438, %v1438
        %v1642 = vpack.c.bf16 %v1439, %v1439
        %v1644 = vsel %vm609, %v1635, 0
        %v1647 = vsel %vm1156, %v1639, 0
        %1649 = vmatpush.bf16.msra.mxu0 0
        %1650 = vmatpush.bf16.msra.mxu0 0
        %1651 = vmatpush.bf16.msra.mxu0 0
        %1652 = vmatpush.bf16.msra.mxu0 0
        %1653 = vmatpush.bf16.msra.mxu0 0
        %1654 = vmatpush.bf16.msra.mxu0 0
        %1655 = vmatpush.bf16.msra.mxu0 0
        %1656 = vmatpush.bf16.msra.mxu0 %v1647
        %1657 = vmatmul.bf16.gmra.mxu0 %v1644
        %v1658 = vpop.f32.mrf.mxu0
        %v1659 = vadd.f32 0.0, %v1658
        %v1660 = vpop.f32.mrf.mxu0
        %1661 = vdwg.mxu0
        %v1663 = vsel %vm609, %v1636, 0
        %v1666 = vsel %vm1156, %v1640, 0
        %1668 = vmatpush.bf16.msra.mxu0 0
        %1669 = vmatpush.bf16.msra.mxu0 0
        %1670 = vmatpush.bf16.msra.mxu0 0
        %1671 = vmatpush.bf16.msra.mxu0 0
        %1672 = vmatpush.bf16.msra.mxu0 0
        %1673 = vmatpush.bf16.msra.mxu0 0
        %1674 = vmatpush.bf16.msra.mxu0 0
        %1675 = vmatpush.bf16.msra.mxu0 %v1666
        %1676 = vmatmul.bf16.gmra.mxu0 %v1663
        %v1677 = vpop.f32.mrf.mxu0
        %v1678 = vadd.f32 0.0, %v1677
        %v1679 = vpop.f32.mrf.mxu0
        %1680 = vdwg.mxu0
        %v1682 = vsel %vm609, %v1637, 0
        %v1685 = vsel %vm1156, %v1641, 0
        %1687 = vmatpush.bf16.msra.mxu0 0
        %1688 = vmatpush.bf16.msra.mxu0 0
        %1689 = vmatpush.bf16.msra.mxu0 0
        %1690 = vmatpush.bf16.msra.mxu0 0
        %1691 = vmatpush.bf16.msra.mxu0 0
        %1692 = vmatpush.bf16.msra.mxu0 0
        %1693 = vmatpush.bf16.msra.mxu0 0
        %1694 = vmatpush.bf16.msra.mxu0 %v1685
        %1695 = vmatmul.bf16.gmra.mxu0 %v1682
        %v1696 = vpop.f32.mrf.mxu0
        %v1697 = vadd.f32 0.0, %v1696
        %v1698 = vpop.f32.mrf.mxu0
        %1699 = vdwg.mxu0
        %v1701 = vsel %vm609, %v1638, 0
        %v1704 = vsel %vm1156, %v1642, 0
        %1706 = vmatpush.bf16.msra.mxu0 0
        %1707 = vmatpush.bf16.msra.mxu0 0
        %1708 = vmatpush.bf16.msra.mxu0 0
        %1709 = vmatpush.bf16.msra.mxu0 0
        %1710 = vmatpush.bf16.msra.mxu0 0
        %1711 = vmatpush.bf16.msra.mxu0 0
        %1712 = vmatpush.bf16.msra.mxu0 0
        %1713 = vmatpush.bf16.msra.mxu0 %v1704
        %1714 = vmatmul.bf16.gmra.mxu0 %v1701
        %v1715 = vpop.f32.mrf.mxu0
        %v1716 = vadd.f32 0.0, %v1715
        %v1717 = vpop.f32.mrf.mxu0
        %1718 = vdwg.mxu0
        %v1719 = vpack.c.bf16 %v1659, %v1659
        %v1720 = vpack.c.bf16 %v1678, %v1678
        %v1721 = vpack.c.bf16 %v1697, %v1697
        %v1722 = vpack.c.bf16 %v1716, %v1716
        %s1723 = scalar_lea.vmem [#allocation11], 16
        %v1724 = vld [vmem:[%s1723] sm:$0xf]
        %v1725 = vld [vmem:[%s1723 + $0x4] sm:$0xf]
        %v1726 = vld [vmem:[%s1723 + $0x8] sm:$0xf]
        %v1727 = vld [vmem:[%s1723 + $0xc] sm:$0xf]
        %v1732 = vunpack.c.l.b16 %v1719
        %v1733 = vunpack.c.l.b16 %v1720
        %v1734 = vunpack.c.l.b16 %v1721
        %v1735 = vunpack.c.l.b16 %v1722
        %v1736 = vrot.slane %v1733, 7
        %vm1737 = vcmask 1041409
        %v1738 = vsel %vm1737, %v1736, %v1732
        %v1739 = vrot.slane %v1734, 6
        %vm1740 = vcmask 1042434
        %v1741 = vsel %vm1740, %v1739, %v1738
        %v1742 = vrot.slane %v1735, 5
        %vm1743 = vcmask 1043459
        %v1744 = vsel %vm1743, %v1742, %v1741
        %v1745 = vpack.c.b16 %v1744, %v1744
        %v1750 = vunpack.c.l.b16 %v1724
        %v1751 = vunpack.c.l.b16 %v1725
        %v1752 = vunpack.c.l.b16 %v1726
        %v1753 = vunpack.c.l.b16 %v1727
        %v1754 = vpack.c.b16 %v1751, %v1750
        %v1755 = vpack.c.b16 %v1753, %v1752
        %v1759 = vsel %vm1059, %v1745, 0
        %1761 = vmatpush.bf16.msra.mxu0 0
        %1762 = vmatpush.bf16.msra.mxu0 0
        %1763 = vmatpush.bf16.msra.mxu0 0
        %1764 = vmatpush.bf16.msra.mxu0 0
        %1765 = vmatpush.bf16.msra.mxu0 0
        %1766 = vmatpush.bf16.msra.mxu0 0
        %1767 = vmatpush.bf16.msra.mxu0 %v1755
        %1768 = vmatpush.bf16.msra.mxu0 %v1754
        %1769 = vmatmul.bf16.gmra.mxu0 %v1759
        %v1770 = vpop.f32.mrf.mxu0
        %v1771 = vadd.f32 0.0, %v1770
        %v1772 = vpop.f32.mrf.mxu0
        %1773 = vdwg.mxu0
        %v1778 = vunpack.c.l.b16 %v1627
        %v1779 = vunpack.c.l.b16 %v1628
        %v1780 = vunpack.c.l.b16 %v1629
        %v1781 = vunpack.c.l.b16 %v1630
        %v1782 = vrot.slane %v1779, 7
        %v1783 = vsel %vm1737, %v1782, %v1778
        %v1784 = vrot.slane %v1780, 6
        %v1785 = vsel %vm1740, %v1784, %v1783
        %v1786 = vrot.slane %v1781, 5
        %v1787 = vsel %vm1743, %v1786, %v1785
        %v1788 = vpack.c.b16 %v1787, %v1787
        %v1793 = vunpack.c.l.b16 %v1631
        %v1794 = vunpack.c.l.b16 %v1632
        %v1795 = vunpack.c.l.b16 %v1633
        %v1796 = vunpack.c.l.b16 %v1634
        %v1797 = vpack.c.b16 %v1794, %v1793
        %v1798 = vpack.c.b16 %v1796, %v1795
        %v1802 = vsel %vm1059, %v1788, 0
        %1804 = vmatpush.bf16.msra.mxu0 0
        %1805 = vmatpush.bf16.msra.mxu0 0
        %1806 = vmatpush.bf16.msra.mxu0 0
        %1807 = vmatpush.bf16.msra.mxu0 0
        %1808 = vmatpush.bf16.msra.mxu0 0
        %1809 = vmatpush.bf16.msra.mxu0 0
        %1810 = vmatpush.bf16.msra.mxu0 %v1798
        %1811 = vmatpush.bf16.msra.mxu0 %v1797
        %1812 = vmatmul.bf16.gmra.mxu0 %v1802
        %v1813 = vpop.f32.mrf.mxu0
        %v1814 = vadd.f32 %v1771, %v1813
        %v1815 = vpop.f32.mrf.mxu0
        %1816 = vdwg.mxu0
        %v1817 = vpack.c.bf16 %v1539, %v1539
        %v1818 = vpack.c.bf16 %v1540, %v1540
        %v1819 = vpack.c.bf16 %v1541, %v1541
        %v1820 = vpack.c.bf16 %v1542, %v1542
        %v1822 = vsel %vm609, %v1817, 0
        %1824 = vmatpush.bf16.msra.mxu0 0
        %1825 = vmatpush.bf16.msra.mxu0 0
        %1826 = vmatpush.bf16.msra.mxu0 0
        %1827 = vmatpush.bf16.msra.mxu0 0
        %1828 = vmatpush.bf16.msra.mxu0 0
        %1829 = vmatpush.bf16.msra.mxu0 0
        %1830 = vmatpush.bf16.msra.mxu0 0
        %1831 = vmatpush.bf16.msra.mxu0 %v1555
        %1832 = vmatmul.bf16.gmra.mxu0 %v1822
        %v1833 = vpop.f32.mrf.mxu0
        %v1834 = vadd.f32 0.0, %v1833
        %v1835 = vpop.f32.mrf.mxu0
        %1836 = vdwg.mxu0
        %v1838 = vsel %vm609, %v1818, 0
        %1840 = vmatpush.bf16.msra.mxu0 0
        %1841 = vmatpush.bf16.msra.mxu0 0
        %1842 = vmatpush.bf16.msra.mxu0 0
        %1843 = vmatpush.bf16.msra.mxu0 0
        %1844 = vmatpush.bf16.msra.mxu0 0
        %1845 = vmatpush.bf16.msra.mxu0 0
        %1846 = vmatpush.bf16.msra.mxu0 0
        %1847 = vmatpush.bf16.msra.mxu0 %v1574
        %1848 = vmatmul.bf16.gmra.mxu0 %v1838
        %v1849 = vpop.f32.mrf.mxu0
        %v1850 = vadd.f32 0.0, %v1849
        %v1851 = vpop.f32.mrf.mxu0
        %1852 = vdwg.mxu0
        %v1854 = vsel %vm609, %v1819, 0
        %1856 = vmatpush.bf16.msra.mxu0 0
        %1857 = vmatpush.bf16.msra.mxu0 0
        %1858 = vmatpush.bf16.msra.mxu0 0
        %1859 = vmatpush.bf16.msra.mxu0 0
        %1860 = vmatpush.bf16.msra.mxu0 0
        %1861 = vmatpush.bf16.msra.mxu0 0
        %1862 = vmatpush.bf16.msra.mxu0 0
        %1863 = vmatpush.bf16.msra.mxu0 %v1593
        %1864 = vmatmul.bf16.gmra.mxu0 %v1854
        %v1865 = vpop.f32.mrf.mxu0
        %v1866 = vadd.f32 0.0, %v1865
        %v1867 = vpop.f32.mrf.mxu0
        %1868 = vdwg.mxu0
        %v1870 = vsel %vm609, %v1820, 0
        %1872 = vmatpush.bf16.msra.mxu0 0
        %1873 = vmatpush.bf16.msra.mxu0 0
        %1874 = vmatpush.bf16.msra.mxu0 0
        %1875 = vmatpush.bf16.msra.mxu0 0
        %1876 = vmatpush.bf16.msra.mxu0 0
        %1877 = vmatpush.bf16.msra.mxu0 0
        %1878 = vmatpush.bf16.msra.mxu0 0
        %1879 = vmatpush.bf16.msra.mxu0 %v1612
        %1880 = vmatmul.bf16.gmra.mxu0 %v1870
        %v1881 = vpop.f32.mrf.mxu0
        %v1882 = vadd.f32 0.0, %v1881
        %v1883 = vpop.f32.mrf.mxu0
        %1884 = vdwg.mxu0
        %v1885 = vpack.c.bf16 %v1834, %v1834
        %v1886 = vpack.c.bf16 %v1850, %v1850
        %v1887 = vpack.c.bf16 %v1866, %v1866
        %v1888 = vpack.c.bf16 %v1882, %v1882
        %s1889 = scalar_lea.vmem [#allocation11], 32
        %v1890 = vld [vmem:[%s1889] sm:$0xf]
        %v1891 = vld [vmem:[%s1889 + $0x4] sm:$0xf]
        %v1892 = vld [vmem:[%s1889 + $0x8] sm:$0xf]
        %v1893 = vld [vmem:[%s1889 + $0xc] sm:$0xf]
        %v1898 = vunpack.c.l.b16 %v1885
        %v1899 = vunpack.c.l.b16 %v1886
        %v1900 = vunpack.c.l.b16 %v1887
        %v1901 = vunpack.c.l.b16 %v1888
        %v1902 = vrot.slane %v1899, 7
        %v1903 = vsel %vm1737, %v1902, %v1898
        %v1904 = vrot.slane %v1900, 6
        %v1905 = vsel %vm1740, %v1904, %v1903
        %v1906 = vrot.slane %v1901, 5
        %v1907 = vsel %vm1743, %v1906, %v1905
        %v1908 = vpack.c.b16 %v1907, %v1907
        %v1913 = vunpack.c.l.b16 %v1890
        %v1914 = vunpack.c.l.b16 %v1891
        %v1915 = vunpack.c.l.b16 %v1892
        %v1916 = vunpack.c.l.b16 %v1893
        %v1917 = vpack.c.b16 %v1914, %v1913
        %v1918 = vpack.c.b16 %v1916, %v1915
        %v1922 = vsel %vm1059, %v1908, 0
        %1924 = vmatpush.bf16.msra.mxu0 0
        %1925 = vmatpush.bf16.msra.mxu0 0
        %1926 = vmatpush.bf16.msra.mxu0 0
        %1927 = vmatpush.bf16.msra.mxu0 0
        %1928 = vmatpush.bf16.msra.mxu0 0
        %1929 = vmatpush.bf16.msra.mxu0 0
        %1930 = vmatpush.bf16.msra.mxu0 %v1918
        %1931 = vmatpush.bf16.msra.mxu0 %v1917
        %1932 = vmatmul.bf16.gmra.mxu0 %v1922
        %v1933 = vpop.f32.mrf.mxu0
        %v1934 = vadd.f32 0.0, %v1933
        %v1935 = vpop.f32.mrf.mxu0
        %1936 = vdwg.mxu0
        %v1937 = vadd.f32 %v1814, %v1934
        %v1938 = vperm.slane %v1032, 0
        %v1939 = vadd.f32 %v1937, %v1938
        %v1940 = vmax.f32 %v1939, 0.0
        %v1941 = vand.u32 2147483647, %v1940
        %vm1942 = vcmask 257024
        %v1943 = vsel %vm1942, %v1941, 0.0
        %1944 = vadd.xlane.f32.xlu0 %v1943
        %v1945 = vpop.xlane.xlu0 %1944
        %v1946 = vmax.f32 %v1945, 1e-12
        %v1947 = vrcp.pop %v1946
        %v1948 = vmul.f32 %v1940, %v1947
        %v1949 = vxor.u32 %v1948, 2147483648
        %v1950 = vmul.f32 %v1949, 1.442695
        %v1951 = vpow.pop %v1950
        %v1952 = vadd.f32 %v1951, 1.0
        %v1953 = vrcp.pop %v1952
        %v1954 = vmul.f32 %v1952, %v1953
        %v1955 = vsub.f32 1.0, %v1954
        %v1956 = vmul.f32 %v1953, %v1955
        %v1957 = vadd.f32 %v1953, %v1956
        %vm1958 = vweird.f32 %v1952
        %vm1959 = vweird.f32 %v1953
        %vm1960 = vmor %vm1958, %vm1959
        %v1961 = vsel %vm1960, %v1953, %v1957
        %v1962 = vand.u32 2147483647, %v1952
        %vm1963 = vcmp.eq.f32.partialorder %v1962, 8.507059e+37
        %v1964 = vand.u32 %v1952, 2147483648
        %v1965 = vor.u32 1.1754944e-38, %v1964
        %v1966 = vsel %vm1963, %v1965, %v1961
        %v1967 = vmul.f32 1.0, %v1966
        %1968 = vst.msk [vmem:[%s589] sm:$0xf] %vm1942, %v1967
        %v1969 = vld [vmem:[%s8] sm:$0xff]
        %v1970 = vld [vmem:[%s8 + $0x8] sm:$0xff]
        %v1971 = vld [vmem:[%s8 + $0x10] sm:$0xff]
        %v1972 = vld [vmem:[%s8 + $0x18] sm:$0xff]
        %v1973 = vld [vmem:[%s9] sm:$0x1]
        %v1975 = vperm.slane %v1973, 0
        %v1978 = vsel %vm1059, %v1948, 0
        %1980 = vmatpush.msra.mxu0 0.0
        %1981 = vmatpush.msra.mxu0 0.0
        %1982 = vmatpush.msra.mxu0 0.0
        %1983 = vmatpush.msra.mxu0 0.0
        %1984 = vmatpush.msra.mxu0 0.0
        %1985 = vmatpush.msra.mxu0 0.0
        %1986 = vmatpush.msra.mxu0 0.0
        %1987 = vmatpush.msra.mxu0 0.0
        %1988 = vmatpush.msra.mxu0 0.0
        %1989 = vmatpush.msra.mxu0 0.0
        %1990 = vmatpush.msra.mxu0 0.0
        %1991 = vmatpush.msra.mxu0 0.0
        %1992 = vmatpush.msra.mxu0 %v1972
        %1993 = vmatpush.msra.mxu0 %v1971
        %1994 = vmatpush.msra.mxu0 %v1970
        %1995 = vmatpush.msra.mxu0 %v1969
        %1996 = vmatmul.f32.gmra.mxu0 %v1978
        %v1997 = vpop.f32.mrf.mxu0
        %v1998 = vadd.f32 %v1975, %v1997
        %1999 = vdwg.mxu0
        %vm2000 = vcmask 27648
        %2001 = vst.msk [vmem:[%s582] sm:$0xf] %vm2000, %v1998
        %s2002 = sand.u32 %s282, 1
        %s2003 = scalar_lea.sflag [#allocation4], %s2002
        %s2004 = sand.u32 %s282, 1
        %s2005 = smul.addr %s2004, 4
        %s2006 = scalar_lea.vmem [#allocation13], %s2005
        %s2007 = sand.u32 %s308, 1
        %s2008 = scalar_lea.sflag [#allocation15], %s2007
        %s2009 = sand.u32 %s308, 1
        %s2010 = smul.addr %s2009, 4
        %s2011 = scalar_lea.vmem [#allocation14], %s2010
        // Predicated region
        $region85: #{tpu_custom_call.1} parent=59 // pred_check
          %p2012 = pneg %p292
        $region86: #{tpu_custom_call.1} parent=59 // pred_check_branch
          %2014 = sbr.rel (%p2012) target = $region88
        $region87: #{tpu_custom_call.1} parent=59 // pred_region
          %2016 = vsyncadd %s2003, 0
          %s2017 = smul.addr %s39, 4
          %s2018 = scalar_lea.hbm %s10, %s2017
          %s2020 = sshll.u32 %s2006, 4
          %s2021 = int_to_ptr.vmem [resolvable:$true] %s2020
          %s2022 = sshll.u32 %s2018, 4
          %s2023 = int_to_ptr.hbm [resolvable:$true] %s2022
          %2025 = dma.vmem_to_hbm [thread:$0]  %s2021, 64, %s2023, %s2003
        $region88: #{tpu_custom_call.1} parent=59 // pred_fallthru
          _
        // Predicated region
        $region89: #{tpu_custom_call.1} parent=59 // pred_check
          %p2026 = pneg %p318
        $region90: #{tpu_custom_call.1} parent=59 // pred_check_branch
          %2028 = sbr.rel (%p2026) target = $region92
        $region91: #{tpu_custom_call.1} parent=59 // pred_region
          %2030 = vsyncadd %s2008, 0
          %s2031 = smul.addr %s39, 4
          %s2032 = scalar_lea.hbm %s11, %s2031
          %s2034 = sshll.u32 %s2011, 4
          %s2035 = int_to_ptr.vmem [resolvable:$true] %s2034
          %s2036 = sshll.u32 %s2032, 4
          %s2037 = int_to_ptr.hbm [resolvable:$true] %s2036
          %2039 = dma.vmem_to_hbm [thread:$0]  %s2035, 64, %s2037, %s2008
        $region92: #{tpu_custom_call.1} parent=59 // pred_fallthru
          _
      $region60: #{tpu_custom_call.1} parent=5 // pred_fallthru
        _
      %p2040 = scmp.le.s32.totalorder 2, %s34
      // Predicated region
      $region93: #{tpu_custom_call.1} parent=5 // pred_check
        %p2041 = pneg %p2040
      $region94: #{tpu_custom_call.1} parent=5 // pred_check_branch
        %2043 = sbr.rel (%p2041) target = $region96
      $region95: #{tpu_custom_call.1} parent=5 // pred_region
        %s2044 = ssub.s32 %s34, 2
        // Predicated region
        $region97: #{tpu_custom_call.1} parent=95 // pred_check
          %p2045 = pneg %p298
        $region98: #{tpu_custom_call.1} parent=95 // pred_check_branch
          %2047 = sbr.rel (%p2045) target = $region100
        $region99: #{tpu_custom_call.1} parent=95 // pred_region
          %s2048 = sand.u32 %s283, 1
          %s2049 = scalar_lea.sflag [#allocation4], %s2048
          %s2050 = sand.u32 %s283, 1
          %s2051 = smul.addr %s2050, 4
          %s2052 = scalar_lea.vmem [#allocation13], %s2051
          %2054 = dma.done %s2049, 64
        $region100: #{tpu_custom_call.1} parent=95 // pred_fallthru
          _
        // Predicated region
        $region101: #{tpu_custom_call.1} parent=95 // pred_check
          %p2055 = pneg %p324
        $region102: #{tpu_custom_call.1} parent=95 // pred_check_branch
          %2057 = sbr.rel (%p2055) target = $region104
        $region103: #{tpu_custom_call.1} parent=95 // pred_region
          %s2058 = sand.u32 %s309, 1
          %s2059 = scalar_lea.sflag [#allocation15], %s2058
          %s2060 = sand.u32 %s309, 1
          %s2061 = smul.addr %s2060, 4
          %s2062 = scalar_lea.vmem [#allocation14], %s2061
          %2064 = dma.done %s2059, 64
        $region104: #{tpu_custom_call.1} parent=95 // pred_fallthru
          _
      $region96: #{tpu_custom_call.1} parent=5 // pred_fallthru
        _
    $region6: #{tpu_custom_call.1} parent=1 // loop_footer
      %s38 = sadd.s32 1, %s34
    $region7: #{tpu_custom_call.1} parent=1 // loop_footer_branch
      %33 = sbr.rel target = $region3
    $region8: #{tpu_custom_call.1} parent=1 // loop_exit
      _
    %2065 = vsyncpa [#allocation3], 1
    %s2066 = scalar_lea.sflag [#allocation3], 1
    %2067 = vsyncpa %s2066, 1
    %2068 = vsyncpa [#allocation6], 1
    %s2069 = scalar_lea.sflag [#allocation6], 1
    %2070 = vsyncpa %s2069, 1
    %2071 = vsyncpa [#allocation9], 1
    %s2072 = scalar_lea.sflag [#allocation9], 1
    %2073 = vsyncpa %s2072, 1
    %2074 = vsyncpa [#allocation12], 1
    %2075 = vsyncpa [#allocation4], 1
    %s2076 = scalar_lea.sflag [#allocation4], 1
    %2077 = vsyncpa %s2076, 1
    %2078 = vsyncpa [#allocation15], 1
    %s2079 = scalar_lea.sflag [#allocation15], 1
    %2080 = vsyncpa %s2079, 1

</llo_original>
